<compile_context>
chip_gen: v5e
topology: v5e:2x2
jax: 0.10.0
libtpu: 0.0.40
codegen_flags: <defaults>
</compile_context>

<pallas_src>
import jax
import jax.numpy as jnp
from jax.experimental import pallas as pl
from jax.experimental.pallas import tpu as pltpu

# ----------------------------- problem sizes -----------------------------
B = 2           # batch
N_SEG = 2       # N (number of segments along the target length)
L = 16          # target length (must be divisible by N_SEG)
S = 8           # encoder source length
D = 32          # d_q == d_model
DKV = 32        # d_kv (> 0 -> cross attention enabled)
NUM_HEADS = 4
LSEG = L // N_SEG
DP_CROSS = D            # cross-attn d_proj
DP_SELF = D // 4        # self-attn d_proj
DFF = 4 * D             # ffn hidden (must be <= 128 for this slab layout)

# ----------------------------- packed slab layout -----------------------------
SLAB_W = 128            # lane width of the packed constants/weights slab
VEC_ROWS = 16           # 14 used bias/LN rows, padded to a multiple of 8

# row layout of the packed bias/LN vector block (rows 0..15, lane 0..)
_R_LN_CA_G, _R_LN_CA_B = 0, 1
_R_CA_BQ, _R_CA_BKV, _R_CA_BO = 2, 3, 4
_R_CONV_B = 5
_R_LN_FFN_G, _R_LN_FFN_B = 6, 7
_R_FFN_B1, _R_FFN_B2 = 8, 9
_R_LN_SA_G, _R_LN_SA_B = 10, 11
_R_SA_BQKV, _R_SA_BO = 12, 13

# sublane offsets of every constant / weight block (all start at lane 0)
ROW_SEGBIAS = VEC_ROWS              # (L, L)   additive block-diagonal mask (0 / -1e30)
ROW_MPREV = ROW_SEGBIAS + L         # (L, D)   0/1 mask (zero where row % LSEG == 0)
ROW_MNEXT = ROW_MPREV + L           # (L, D)   0/1 mask (zero where row % LSEG == LSEG-1)
ROW_CA_WQ = ROW_MNEXT + L           # (D, DP_CROSS)
ROW_CA_WKV = ROW_CA_WQ + D          # (DKV, 2*DP_CROSS)
ROW_CA_WO = ROW_CA_WKV + DKV        # (DP_CROSS, D)
ROW_FFN_W1 = ROW_CA_WO + DP_CROSS   # (D, DFF)
ROW_FFN_W2 = ROW_FFN_W1 + D         # (DFF, D)
ROW_CONV = ROW_FFN_W2 + DFF         # (3*D, D)  [w_prev; w_cur; w_next]
ROW_SA_WQKV = ROW_CONV + 3 * D      # (D, 3*DP_SELF)
ROW_SA_WO = ROW_SA_WQKV + D         # (DP_SELF, D)
R_SLAB = -(-(ROW_SA_WO + DP_SELF) // 8) * 8

assert DFF <= SLAB_W and L <= SLAB_W and 2 * DP_CROSS <= SLAB_W


# ----------------------------- in-kernel helpers -----------------------------
def _layer_norm(x, g, b, eps=1e-5):
    # independent reductions (E[x^2] and E[x]) -> shorter XLU dependency chain
    mean = jnp.mean(x, axis=-1, keepdims=True)
    mean2 = jnp.mean(x * x, axis=-1, keepdims=True)
    var = mean2 - mean * mean
    return (x - mean) * jax.lax.rsqrt(var + eps) * g + b


def _softmax_rows(logits):
    logits = logits - jnp.max(logits, axis=-1, keepdims=True)
    e = jnp.exp(logits)
    return e * pl.reciprocal(jnp.sum(e, axis=-1, keepdims=True), approx=True)


# ----------------------------- fused kernel -----------------------------
def decoder_block_kernel(inp_ref, enc_ref, w_ref, out_ref):
    f32 = jnp.float32
    x_in = inp_ref[0].astype(f32)           # (L, D)
    enc = enc_ref[0].astype(f32)            # (S, DKV)

    # ---- packed LN / bias vectors (one row each) ----
    V = w_ref[0:VEC_ROWS, :]
    ln_ca_g = V[_R_LN_CA_G:_R_LN_CA_G + 1, 0:D]
    ln_ca_b = V[_R_LN_CA_B:_R_LN_CA_B + 1, 0:D]
    ca_bq = V[_R_CA_BQ:_R_CA_BQ + 1, 0:DP_CROSS]
    ca_bkv = V[_R_CA_BKV:_R_CA_BKV + 1, 0:2 * DP_CROSS]
    ca_bo = V[_R_CA_BO:_R_CA_BO + 1, 0:D]
    conv_b = V[_R_CONV_B:_R_CONV_B + 1, 0:D]
    ln_ffn_g = V[_R_LN_FFN_G:_R_LN_FFN_G + 1, 0:D]
    ln_ffn_b = V[_R_LN_FFN_B:_R_LN_FFN_B + 1, 0:D]
    ffn_b1 = V[_R_FFN_B1:_R_FFN_B1 + 1, 0:DFF]
    ffn_b2 = V[_R_FFN_B2:_R_FFN_B2 + 1, 0:D]
    ln_sa_g = V[_R_LN_SA_G:_R_LN_SA_G + 1, 0:D]
    ln_sa_b = V[_R_LN_SA_B:_R_LN_SA_B + 1, 0:D]
    sa_bqkv = V[_R_SA_BQKV:_R_SA_BQKV + 1, 0:3 * DP_SELF]
    sa_bo = V[_R_SA_BO:_R_SA_BO + 1, 0:D]

    # ---- host-packed constants (no iota/compare/select on the hot path) ----
    segbias = w_ref[ROW_SEGBIAS:ROW_SEGBIAS + L, 0:L]     # (L, L) 0 / -1e30
    mprev = w_ref[ROW_MPREV:ROW_MPREV + L, 0:D]           # (L, D) 0/1
    mnext = w_ref[ROW_MNEXT:ROW_MNEXT + L, 0:D]           # (L, D) 0/1

    # ---- weights (lane-0, sublane-aligned windows of the slab) ----
    ca_wq = w_ref[ROW_CA_WQ:ROW_CA_WQ + D, 0:DP_CROSS]
    ca_wkv = w_ref[ROW_CA_WKV:ROW_CA_WKV + DKV, 0:2 * DP_CROSS]
    ca_wo = w_ref[ROW_CA_WO:ROW_CA_WO + DP_CROSS, 0:D]
    ffn_w1 = w_ref[ROW_FFN_W1:ROW_FFN_W1 + D, 0:DFF]
    ffn_w2 = w_ref[ROW_FFN_W2:ROW_FFN_W2 + DFF, 0:D]
    conv_w0 = w_ref[ROW_CONV:ROW_CONV + D, 0:D]
    conv_w1 = w_ref[ROW_CONV + D:ROW_CONV + 2 * D, 0:D]
    conv_w2 = w_ref[ROW_CONV + 2 * D:ROW_CONV + 3 * D, 0:D]
    sa_wqkv = w_ref[ROW_SA_WQKV:ROW_SA_WQKV + D, 0:3 * DP_SELF]
    sa_wo = w_ref[ROW_SA_WO:ROW_SA_WO + DP_SELF, 0:D]

    # ---- cross attention: LN(x) -> MHA(x, enc, enc) ----
    x = _layer_norm(x_in, ln_ca_g, ln_ca_b)
    q = jnp.dot(x, ca_wq, preferred_element_type=f32) + ca_bq          # (L, DP_CROSS)
    kv = jnp.dot(enc, ca_wkv, preferred_element_type=f32) + ca_bkv     # (S, 2*DP_CROSS)
    k = kv[:, 0:DP_CROSS]
    v = kv[:, DP_CROSS:2 * DP_CROSS]
    hd = DP_CROSS // NUM_HEADS
    q = q * (hd ** -0.5)
    heads = []
    for h in range(NUM_HEADS):
        sl = slice(h * hd, (h + 1) * hd)
        logits = jax.lax.dot_general(q[:, sl], k[:, sl], (((1,), (1,)), ((), ())),
                                     preferred_element_type=f32)       # (L, S)
        heads.append(jnp.dot(_softmax_rows(logits), v[:, sl],
                             preferred_element_type=f32))              # (L, hd)
    ctx = jnp.concatenate(heads, axis=-1)                              # (L, DP_CROSS)
    x_ca = jnp.dot(ctx, ca_wo, preferred_element_type=f32) + ca_bo     # hoisted out-proj

    # ---- per-segment Conv1d(kernel=3, padding=1) + ReLU ----
    # roll(+1) brings row i-1, roll(L-1) brings row i+1; boundary masks zero the
    # rows that would cross a segment (or wrap around the sequence).
    xprev = pltpu.roll(x_ca, 1, 0) * mprev
    xnext = pltpu.roll(x_ca, L - 1, 0) * mnext
    y = (jnp.dot(xprev, conv_w0, preferred_element_type=f32)
         + jnp.dot(x_ca, conv_w1, preferred_element_type=f32)
         + jnp.dot(xnext, conv_w2, preferred_element_type=f32)
         + conv_b)
    x_conv = jnp.maximum(y, 0.0)

    # ---- residual + FFN(conv_out) + residual ----
    res = x_in + x_conv                              # input + drop_path1(conv_out)
    ff = _layer_norm(x_conv, ln_ffn_g, ln_ffn_b)
    ff = jnp.maximum(jnp.dot(ff, ffn_w1, preferred_element_type=f32) + ffn_b1, 0.0)
    ff = jnp.dot(ff, ffn_w2, preferred_element_type=f32) + ffn_b2
    inp2 = res + ff                                  # + drop_path2(ffn_out)

    # ---- segmented self attention: LN -> MHA with block-diagonal additive mask ----
    xs = _layer_norm(inp2, ln_sa_g, ln_sa_b)
    qkv = jnp.dot(xs, sa_wqkv, preferred_element_type=f32) + sa_bqkv   # (L, 3*DP_SELF)
    hds = DP_SELF // NUM_HEADS
    qs = qkv[:, 0:DP_SELF] * (hds ** -0.5)
    ks = qkv[:, DP_SELF:2 * DP_SELF]
    vs = qkv[:, 2 * DP_SELF:3 * DP_SELF]
    heads = []
    for h in range(NUM_HEADS):
        sl = slice(h * hds, (h + 1) * hds)
        logits = jax.lax.dot_general(qs[:, sl], ks[:, sl], (((1,), (1,)), ((), ())),
                                     preferred_element_type=f32) + segbias   # (L, L)
        heads.append(jnp.dot(_softmax_rows(logits), vs[:, sl],
                             preferred_element_type=f32))                    # (L, hds)
    ctx_s = jnp.concatenate(heads, axis=-1)                                  # (L, DP_SELF)
    y_sa = jnp.dot(ctx_s, sa_wo, preferred_element_type=f32) + sa_bo         # hoisted

    out_ref[0] = (inp2 + y_sa).astype(out_ref.dtype)


# ----------------------------- parameters -----------------------------
def init_params(key):
    ks = jax.random.split(key, 12)

    def xavier(k, fin, fout, gain=1.0):
        lim = gain * (6.0 / (fin + fout)) ** 0.5
        return jax.random.uniform(k, (fin, fout), jnp.float32, -lim, lim)

    def kaiming(k, fin, fout):
        lim = (6.0 / fin) ** 0.5
        return jax.random.uniform(k, (fin, fout), jnp.float32, -lim, lim)

    zeros = lambda n: jnp.zeros((1, n), jnp.float32)
    ones = lambda n: jnp.ones((1, n), jnp.float32)

    p = {}
    # encoder_decoder_attn_layer_norm + cross MHA (d_proj = d_out = D)
    p['ln_ca_g'] = ones(D); p['ln_ca_b'] = zeros(D)
    p['ca_wq'] = xavier(ks[0], D, DP_CROSS);   p['ca_bq'] = zeros(DP_CROSS)
    p['ca_wk'] = xavier(ks[1], DKV, DP_CROSS); p['ca_bk'] = zeros(DP_CROSS)
    p['ca_wv'] = xavier(ks[2], DKV, DP_CROSS); p['ca_bv'] = zeros(DP_CROSS)
    p['ca_wo'] = xavier(ks[3], DP_CROSS, D);   p['ca_bo'] = zeros(D)
    # Conv1d(D, D, kernel=3, padding=1): weight (out, in, 3) -> three (in, out) taps
    lim = 1.0 / (D * 3) ** 0.5
    wconv = jax.random.uniform(ks[4], (D, D, 3), jnp.float32, -lim, lim)
    p['conv_w0'] = wconv[:, :, 0].T
    p['conv_w1'] = wconv[:, :, 1].T
    p['conv_w2'] = wconv[:, :, 2].T
    p['conv_b'] = jax.random.uniform(ks[5], (1, D), jnp.float32, -lim, lim)
    # ffn: LN -> Linear(D, 4D) -> ReLU -> Linear(4D, D)
    p['ln_ffn_g'] = ones(D); p['ln_ffn_b'] = zeros(D)
    p['ffn_w1'] = kaiming(ks[6], D, DFF); p['ffn_b1'] = zeros(DFF)
    p['ffn_w2'] = xavier(ks[7], DFF, D);  p['ffn_b2'] = zeros(D)
    # self_attn_layer_norm + self MHA (d_proj = D // 4, d_out = D)
    p['ln_sa_g'] = ones(D); p['ln_sa_b'] = zeros(D)
    p['sa_wq'] = xavier(ks[8], D, DP_SELF);  p['sa_bq'] = zeros(DP_SELF)
    p['sa_wk'] = xavier(ks[9], D, DP_SELF);  p['sa_bk'] = zeros(DP_SELF)
    p['sa_wv'] = xavier(ks[10], D, DP_SELF); p['sa_bv'] = zeros(DP_SELF)
    p['sa_wo'] = xavier(ks[11], DP_SELF, D); p['sa_bo'] = zeros(D)
    return p


def pack_params(p):
    """One-time packing: all weights, LN/bias vectors, the self-attn block-diagonal
    mask bias and the conv boundary masks go into a single (R_SLAB, 128) f32 slab so
    the kernel sees exactly 3 inputs (inp, enc, slab) -> 3 DMAs."""
    slab = jnp.zeros((R_SLAB, SLAB_W), jnp.float32)

    def put(s, r, mat, c=0):
        mat = jnp.asarray(mat, jnp.float32)
        return s.at[r:r + mat.shape[0], c:c + mat.shape[1]].set(mat)

    vec_rows = [
        p['ln_ca_g'], p['ln_ca_b'],
        p['ca_bq'], jnp.concatenate([p['ca_bk'], p['ca_bv']], axis=1),
        p['ca_bo'], p['conv_b'],
        p['ln_ffn_g'], p['ln_ffn_b'],
        p['ffn_b1'], p['ffn_b2'],
        p['ln_sa_g'], p['ln_sa_b'],
        jnp.concatenate([p['sa_bq'], p['sa_bk'], p['sa_bv']], axis=1),
        p['sa_bo'],
    ]
    for r, vrow in enumerate(vec_rows):
        slab = put(slab, r, vrow)

    # constants: block-diagonal additive mask + conv segment-boundary masks
    ii = jnp.arange(L)[:, None]
    jj = jnp.arange(L)[None, :]
    segbias = jnp.where((ii // LSEG) == (jj // LSEG), 0.0, -1e30)
    mprev = jnp.broadcast_to((ii % LSEG != 0).astype(jnp.float32), (L, D))
    mnext = jnp.broadcast_to((ii % LSEG != LSEG - 1).astype(jnp.float32), (L, D))
    slab = put(slab, ROW_SEGBIAS, segbias)
    slab = put(slab, ROW_MPREV, mprev)
    slab = put(slab, ROW_MNEXT, mnext)

    # weights
    slab = put(slab, ROW_CA_WQ, p['ca_wq'])
    slab = put(slab, ROW_CA_WKV, jnp.concatenate([p['ca_wk'], p['ca_wv']], axis=1))
    slab = put(slab, ROW_CA_WO, p['ca_wo'])
    slab = put(slab, ROW_FFN_W1, p['ffn_w1'])
    slab = put(slab, ROW_FFN_W2, p['ffn_w2'])
    slab = put(slab, ROW_CONV,
               jnp.concatenate([p['conv_w0'], p['conv_w1'], p['conv_w2']], axis=0))
    slab = put(slab, ROW_SA_WQKV,
               jnp.concatenate([p['sa_wq'], p['sa_wk'], p['sa_wv']], axis=1))
    slab = put(slab, ROW_SA_WO, p['sa_wo'])
    return slab


# ----------------------------- forward (wrapper) -----------------------------
@jax.jit
def transformer_decoder_block(inp, enc, slab):
    # N (segments) is baked into the packed constants (segbias / boundary masks).
    B_, L_, D_ = inp.shape
    S_, DKV_ = enc.shape[1], enc.shape[2]
    return pl.pallas_call(
        decoder_block_kernel,
        out_shape=jax.ShapeDtypeStruct((B_, L_, D_), inp.dtype),
        grid=(B_,),
        in_specs=[pl.BlockSpec((1, L_, D_), lambda i: (i, 0, 0)),
                  pl.BlockSpec((1, S_, DKV_), lambda i: (i, 0, 0)),
                  pl.BlockSpec((R_SLAB, SLAB_W), lambda i: (0, 0))],
        out_specs=pl.BlockSpec((1, L_, D_), lambda i: (i, 0, 0)),
        compiler_params=pltpu.CompilerParams(
            dimension_semantics=("parallel",)),
    )(inp, enc, slab)


# ----------------------------- pure-JAX reference -----------------------------
def reference_forward(inp, enc, N, p):
    def ln(x, g, b):
        mean = jnp.mean(x, -1, keepdims=True)
        var = jnp.mean((x - mean) ** 2, -1, keepdims=True)
        return (x - mean) / jnp.sqrt(var + 1e-5) * g + b

    def mha(xq, xkv, wq, bq, wk, bk, wv, bv, wo, bo, nh):
        b_, t, _ = xq.shape
        s_ = xkv.shape[1]
        q = xq @ wq + bq
        k = xkv @ wk + bk
        v = xkv @ wv + bv
        dp = wq.shape[1]; hd = dp // nh
        q = q.reshape(b_, t, nh, hd).transpose(0, 2, 1, 3) * hd ** (-0.5)
        k = k.reshape(b_, s_, nh, hd).transpose(0, 2, 1, 3)
        v = v.reshape(b_, s_, nh, hd).transpose(0, 2, 1, 3)
        attn = jax.nn.softmax(q @ k.transpose(0, 1, 3, 2), axis=-1)
        o = (attn @ v).transpose(0, 2, 1, 3).reshape(b_, t, dp)
        return o @ wo + bo

    B_, L_, D_ = inp.shape
    Lseg = L_ // N
    x = ln(inp, p['ln_ca_g'], p['ln_ca_b'])
    x = mha(x, enc, p['ca_wq'], p['ca_bq'], p['ca_wk'], p['ca_bk'],
            p['ca_wv'], p['ca_bv'], p['ca_wo'], p['ca_bo'], NUM_HEADS)
    xs = x.reshape(B_ * N, Lseg, D_)
    xp = jnp.pad(xs, ((0, 0), (1, 1), (0, 0)))
    xc = (xp[:, :Lseg] @ p['conv_w0'] + xp[:, 1:Lseg + 1] @ p['conv_w1']
          + xp[:, 2:Lseg + 2] @ p['conv_w2'] + p['conv_b'])
    xc = jnp.maximum(xc, 0.0).reshape(B_, L_, D_)
    inp1 = inp + xc
    h = ln(xc, p['ln_ffn_g'], p['ln_ffn_b'])
    h = jnp.maximum(h @ p['ffn_w1'] + p['ffn_b1'], 0.0)
    h = h @ p['ffn_w2'] + p['ffn_b2']
    inp2 = inp1 + h
    y = ln(inp2, p['ln_sa_g'], p['ln_sa_b']).reshape(B_ * N, Lseg, D_)
    y = mha(y, y, p['sa_wq'], p['sa_bq'], p['sa_wk'], p['sa_bk'],
            p['sa_wv'], p['sa_bv'], p['sa_wo'], p['sa_bo'], NUM_HEADS)
    return inp2 + y.reshape(B_, L_, D_)


# ----------------------------- main -----------------------------
if __name__ == "__main__":
    key = jax.random.PRNGKey(0)
    k_inp, k_enc, k_par = jax.random.split(key, 3)
    inp = jax.random.normal(k_inp, (B, L, D), jnp.float32)
    enc = jax.random.normal(k_enc, (B, S, DKV), jnp.float32)
    params = init_params(k_par)
    slab = pack_params(params)

    out = transformer_decoder_block(inp, enc, slab)
    out = jax.block_until_ready(out)

    ref = reference_forward(inp, enc, N_SEG, params)
    assert out.shape == (B, L, D)
    max_err = float(jnp.max(jnp.abs(out - ref)))
    assert jnp.allclose(out, ref, rtol=1e-2, atol=1e-2), f"max abs err {max_err}"
    print("KERNEL_OK")
</pallas_src>

<mosaic_0001>
module attributes {stable_mosaic.version = 11 : i64} {
  func.func @decoder_block_kernel(%arg0: i32, %arg1: memref<1x16x32xf32, #tpu.memory_space<vmem>>, %arg2: memref<1x8x32xf32, #tpu.memory_space<vmem>>, %arg3: memref<456x128xf32, #tpu.memory_space<vmem>>, %arg4: memref<1x16x32xf32, #tpu.memory_space<vmem>>) attributes {dimension_semantics = [#tpu.dimension_semantics<parallel>], iteration_bounds = array<i64: 2>, scalar_prefetch = 0 : i64, scratch_operands = 0 : i64, tpu.core_type = #tpu.core_type<tc>, window_params = [{transform_indices = @transform_0, window_bounds = array<i64: 1, 16, 32>}, {transform_indices = @transform_1, window_bounds = array<i64: 1, 8, 32>}, {pipeline_mode = #tpu.pipeline_mode<synchronous>, transform_indices = @transform_2, window_bounds = array<i64: 456, 128>}, {transform_indices = @transform_3, window_bounds = array<i64: 1, 16, 32>}]} {
    %c0 = arith.constant 0 : index
    %c0_0 = arith.constant 0 : index
    %c0_1 = arith.constant 0 : index
    %0 = vector.load %arg1[%c0, %c0_0, %c0_1] : memref<1x16x32xf32, #tpu.memory_space<vmem>>, vector<1x16x32xf32>
    %1 = vector.shape_cast %0 : vector<1x16x32xf32> to vector<16x32xf32>
    %c0_2 = arith.constant 0 : index
    %c0_3 = arith.constant 0 : index
    %c0_4 = arith.constant 0 : index
    %2 = vector.load %arg2[%c0_2, %c0_3, %c0_4] : memref<1x8x32xf32, #tpu.memory_space<vmem>>, vector<1x8x32xf32>
    %3 = vector.shape_cast %2 : vector<1x8x32xf32> to vector<8x32xf32>
    %c0_5 = arith.constant 0 : index
    %c0_6 = arith.constant 0 : index
    %4 = vector.load %arg3[%c0_5, %c0_6] : memref<456x128xf32, #tpu.memory_space<vmem>>, vector<16x128xf32>
    %5 = vector.extract_strided_slice %4 {offsets = [0, 0], sizes = [1, 32], strides = [1, 1]} : vector<16x128xf32> to vector<1x32xf32>
    %6 = vector.extract_strided_slice %4 {offsets = [1, 0], sizes = [1, 32], strides = [1, 1]} : vector<16x128xf32> to vector<1x32xf32>
    %7 = vector.extract_strided_slice %4 {offsets = [2, 0], sizes = [1, 32], strides = [1, 1]} : vector<16x128xf32> to vector<1x32xf32>
    %8 = vector.extract_strided_slice %4 {offsets = [3, 0], sizes = [1, 64], strides = [1, 1]} : vector<16x128xf32> to vector<1x64xf32>
    %9 = vector.extract_strided_slice %4 {offsets = [4, 0], sizes = [1, 32], strides = [1, 1]} : vector<16x128xf32> to vector<1x32xf32>
    %10 = vector.extract_strided_slice %4 {offsets = [5, 0], sizes = [1, 32], strides = [1, 1]} : vector<16x128xf32> to vector<1x32xf32>
    %11 = vector.extract_strided_slice %4 {offsets = [6, 0], sizes = [1, 32], strides = [1, 1]} : vector<16x128xf32> to vector<1x32xf32>
    %12 = vector.extract_strided_slice %4 {offsets = [7, 0], sizes = [1, 32], strides = [1, 1]} : vector<16x128xf32> to vector<1x32xf32>
    %13 = vector.extract_strided_slice %4 {offsets = [8, 0], sizes = [1, 128], strides = [1, 1]} : vector<16x128xf32> to vector<1x128xf32>
    %14 = vector.extract_strided_slice %4 {offsets = [9, 0], sizes = [1, 32], strides = [1, 1]} : vector<16x128xf32> to vector<1x32xf32>
    %15 = vector.extract_strided_slice %4 {offsets = [10, 0], sizes = [1, 32], strides = [1, 1]} : vector<16x128xf32> to vector<1x32xf32>
    %16 = vector.extract_strided_slice %4 {offsets = [11, 0], sizes = [1, 32], strides = [1, 1]} : vector<16x128xf32> to vector<1x32xf32>
    %17 = vector.extract_strided_slice %4 {offsets = [12, 0], sizes = [1, 24], strides = [1, 1]} : vector<16x128xf32> to vector<1x24xf32>
    %18 = vector.extract_strided_slice %4 {offsets = [13, 0], sizes = [1, 32], strides = [1, 1]} : vector<16x128xf32> to vector<1x32xf32>
    %c16 = arith.constant 16 : index
    %c0_7 = arith.constant 0 : index
    %19 = vector.load %arg3[%c16, %c0_7] : memref<456x128xf32, #tpu.memory_space<vmem>>, vector<16x16xf32>
    %c32 = arith.constant 32 : index
    %c0_8 = arith.constant 0 : index
    %20 = vector.load %arg3[%c32, %c0_8] : memref<456x128xf32, #tpu.memory_space<vmem>>, vector<16x32xf32>
    %c48 = arith.constant 48 : index
    %c0_9 = arith.constant 0 : index
    %21 = vector.load %arg3[%c48, %c0_9] : memref<456x128xf32, #tpu.memory_space<vmem>>, vector<16x32xf32>
    %c64 = arith.constant 64 : index
    %c0_10 = arith.constant 0 : index
    %22 = vector.load %arg3[%c64, %c0_10] : memref<456x128xf32, #tpu.memory_space<vmem>>, vector<32x32xf32>
    %c96 = arith.constant 96 : index
    %c0_11 = arith.constant 0 : index
    %23 = vector.load %arg3[%c96, %c0_11] : memref<456x128xf32, #tpu.memory_space<vmem>>, vector<32x64xf32>
    %c128 = arith.constant 128 : index
    %c0_12 = arith.constant 0 : index
    %24 = vector.load %arg3[%c128, %c0_12] : memref<456x128xf32, #tpu.memory_space<vmem>>, vector<32x32xf32>
    %c160 = arith.constant 160 : index
    %c0_13 = arith.constant 0 : index
    %25 = vector.load %arg3[%c160, %c0_13] : memref<456x128xf32, #tpu.memory_space<vmem>>, vector<32x128xf32>
    %c192 = arith.constant 192 : index
    %c0_14 = arith.constant 0 : index
    %26 = vector.load %arg3[%c192, %c0_14] : memref<456x128xf32, #tpu.memory_space<vmem>>, vector<128x32xf32>
    %c320 = arith.constant 320 : index
    %c0_15 = arith.constant 0 : index
    %27 = vector.load %arg3[%c320, %c0_15] : memref<456x128xf32, #tpu.memory_space<vmem>>, vector<32x32xf32>
    %c352 = arith.constant 352 : index
    %c0_16 = arith.constant 0 : index
    %28 = vector.load %arg3[%c352, %c0_16] : memref<456x128xf32, #tpu.memory_space<vmem>>, vector<32x32xf32>
    %c384 = arith.constant 384 : index
    %c0_17 = arith.constant 0 : index
    %29 = vector.load %arg3[%c384, %c0_17] : memref<456x128xf32, #tpu.memory_space<vmem>>, vector<32x32xf32>
    %c416 = arith.constant 416 : index
    %c0_18 = arith.constant 0 : index
    %30 = vector.load %arg3[%c416, %c0_18] : memref<456x128xf32, #tpu.memory_space<vmem>>, vector<32x24xf32>
    %c448 = arith.constant 448 : index
    %c0_19 = arith.constant 0 : index
    %31 = vector.load %arg3[%c448, %c0_19] : memref<456x128xf32, #tpu.memory_space<vmem>>, vector<8x32xf32>
    %cst = arith.constant dense<0.000000e+00> : vector<16xf32>
    %32 = vector.multi_reduction <add>, %1, %cst [1] : vector<16x32xf32> to vector<16xf32>
    %33 = vector.shape_cast %32 : vector<16xf32> to vector<16x1xf32>
    %cst_20 = arith.constant 3.200000e+01 : f32
    %34 = vector.broadcast %cst_20 : f32 to vector<16x1xf32>
    %35 = arith.divf %33, %34 : vector<16x1xf32>
    %36 = arith.mulf %1, %1 : vector<16x32xf32>
    %cst_21 = arith.constant dense<0.000000e+00> : vector<16xf32>
    %37 = vector.multi_reduction <add>, %36, %cst_21 [1] : vector<16x32xf32> to vector<16xf32>
    %38 = vector.shape_cast %37 : vector<16xf32> to vector<16x1xf32>
    %cst_22 = arith.constant 3.200000e+01 : f32
    %39 = vector.broadcast %cst_22 : f32 to vector<16x1xf32>
    %40 = arith.divf %38, %39 : vector<16x1xf32>
    %41 = arith.mulf %35, %35 : vector<16x1xf32>
    %42 = arith.subf %40, %41 : vector<16x1xf32>
    %43 = vector.broadcast %35 : vector<16x1xf32> to vector<16x32xf32>
    %44 = arith.subf %1, %43 : vector<16x32xf32>
    %cst_23 = arith.constant 9.99999974E-6 : f32
    %45 = vector.broadcast %cst_23 : f32 to vector<16x1xf32>
    %46 = arith.addf %42, %45 : vector<16x1xf32>
    %47 = math.rsqrt %46 : vector<16x1xf32>
    %48 = vector.broadcast %47 : vector<16x1xf32> to vector<16x32xf32>
    %49 = arith.mulf %44, %48 : vector<16x32xf32>
    %50 = vector.broadcast %5 : vector<1x32xf32> to vector<16x32xf32>
    %51 = arith.mulf %49, %50 : vector<16x32xf32>
    %52 = vector.broadcast %6 : vector<1x32xf32> to vector<16x32xf32>
    %53 = arith.addf %51, %52 : vector<16x32xf32>
    %cst_24 = arith.constant dense<0.000000e+00> : vector<16x32xf32>
    %54 = tpu.matmul %53, %22, %cst_24 {dimension_numbers = #tpu.dot_dimension_numbers<[1], [0], [0], [1], [0, 0, 1, 1], [], []>} : vector<16x32xf32>, vector<32x32xf32>, vector<16x32xf32> -> vector<16x32xf32>
    %55 = vector.broadcast %7 : vector<1x32xf32> to vector<16x32xf32>
    %56 = arith.addf %54, %55 : vector<16x32xf32>
    %cst_25 = arith.constant dense<0.000000e+00> : vector<8x64xf32>
    %57 = tpu.matmul %3, %23, %cst_25 {dimension_numbers = #tpu.dot_dimension_numbers<[1], [0], [0], [1], [0, 0, 1, 1], [], []>} : vector<8x32xf32>, vector<32x64xf32>, vector<8x64xf32> -> vector<8x64xf32>
    %58 = vector.broadcast %8 : vector<1x64xf32> to vector<8x64xf32>
    %59 = arith.addf %57, %58 : vector<8x64xf32>
    %60 = vector.extract_strided_slice %59 {offsets = [0, 0], sizes = [8, 32], strides = [1, 1]} : vector<8x64xf32> to vector<8x32xf32>
    %61 = vector.extract_strided_slice %59 {offsets = [0, 32], sizes = [8, 32], strides = [1, 1]} : vector<8x64xf32> to vector<8x32xf32>
    %cst_26 = arith.constant 0.353553385 : f32
    %62 = vector.broadcast %cst_26 : f32 to vector<16x32xf32>
    %63 = arith.mulf %56, %62 : vector<16x32xf32>
    %64 = vector.extract_strided_slice %63 {offsets = [0, 0], sizes = [16, 8], strides = [1, 1]} : vector<16x32xf32> to vector<16x8xf32>
    %65 = vector.extract_strided_slice %60 {offsets = [0, 0], sizes = [8, 8], strides = [1, 1]} : vector<8x32xf32> to vector<8x8xf32>
    %cst_27 = arith.constant dense<0.000000e+00> : vector<16x8xf32>
    %66 = tpu.matmul %64, %65, %cst_27 {dimension_numbers = #tpu.dot_dimension_numbers<[1], [1], [0], [0], [0, 0, 1, 0], [], []>} : vector<16x8xf32>, vector<8x8xf32>, vector<16x8xf32> -> vector<16x8xf32>
    %cst_28 = arith.constant dense<0xFF800000> : vector<16xf32>
    %67 = vector.multi_reduction <maximumf>, %66, %cst_28 [1] : vector<16x8xf32> to vector<16xf32>
    %68 = vector.shape_cast %67 : vector<16xf32> to vector<16x1xf32>
    %69 = vector.broadcast %68 : vector<16x1xf32> to vector<16x8xf32>
    %70 = arith.subf %66, %69 : vector<16x8xf32>
    %71 = math.exp %70 : vector<16x8xf32>
    %cst_29 = arith.constant dense<0.000000e+00> : vector<16xf32>
    %72 = vector.multi_reduction <add>, %71, %cst_29 [1] : vector<16x8xf32> to vector<16xf32>
    %73 = vector.shape_cast %72 : vector<16xf32> to vector<16x1xf32>
    %74 = tpu.reciprocal %73 {approx = true} : vector<16x1xf32> -> vector<16x1xf32>
    %75 = vector.broadcast %74 : vector<16x1xf32> to vector<16x8xf32>
    %76 = arith.mulf %71, %75 : vector<16x8xf32>
    %77 = vector.extract_strided_slice %61 {offsets = [0, 0], sizes = [8, 8], strides = [1, 1]} : vector<8x32xf32> to vector<8x8xf32>
    %cst_30 = arith.constant dense<0.000000e+00> : vector<16x8xf32>
    %78 = tpu.matmul %76, %77, %cst_30 {dimension_numbers = #tpu.dot_dimension_numbers<[1], [0], [0], [1], [0, 0, 1, 1], [], []>} : vector<16x8xf32>, vector<8x8xf32>, vector<16x8xf32> -> vector<16x8xf32>
    %79 = vector.extract_strided_slice %63 {offsets = [0, 8], sizes = [16, 8], strides = [1, 1]} : vector<16x32xf32> to vector<16x8xf32>
    %80 = vector.extract_strided_slice %60 {offsets = [0, 8], sizes = [8, 8], strides = [1, 1]} : vector<8x32xf32> to vector<8x8xf32>
    %cst_31 = arith.constant dense<0.000000e+00> : vector<16x8xf32>
    %81 = tpu.matmul %79, %80, %cst_31 {dimension_numbers = #tpu.dot_dimension_numbers<[1], [1], [0], [0], [0, 0, 1, 0], [], []>} : vector<16x8xf32>, vector<8x8xf32>, vector<16x8xf32> -> vector<16x8xf32>
    %cst_32 = arith.constant dense<0xFF800000> : vector<16xf32>
    %82 = vector.multi_reduction <maximumf>, %81, %cst_32 [1] : vector<16x8xf32> to vector<16xf32>
    %83 = vector.shape_cast %82 : vector<16xf32> to vector<16x1xf32>
    %84 = vector.broadcast %83 : vector<16x1xf32> to vector<16x8xf32>
    %85 = arith.subf %81, %84 : vector<16x8xf32>
    %86 = math.exp %85 : vector<16x8xf32>
    %cst_33 = arith.constant dense<0.000000e+00> : vector<16xf32>
    %87 = vector.multi_reduction <add>, %86, %cst_33 [1] : vector<16x8xf32> to vector<16xf32>
    %88 = vector.shape_cast %87 : vector<16xf32> to vector<16x1xf32>
    %89 = tpu.reciprocal %88 {approx = true} : vector<16x1xf32> -> vector<16x1xf32>
    %90 = vector.broadcast %89 : vector<16x1xf32> to vector<16x8xf32>
    %91 = arith.mulf %86, %90 : vector<16x8xf32>
    %92 = vector.extract_strided_slice %61 {offsets = [0, 8], sizes = [8, 8], strides = [1, 1]} : vector<8x32xf32> to vector<8x8xf32>
    %cst_34 = arith.constant dense<0.000000e+00> : vector<16x8xf32>
    %93 = tpu.matmul %91, %92, %cst_34 {dimension_numbers = #tpu.dot_dimension_numbers<[1], [0], [0], [1], [0, 0, 1, 1], [], []>} : vector<16x8xf32>, vector<8x8xf32>, vector<16x8xf32> -> vector<16x8xf32>
    %94 = vector.extract_strided_slice %63 {offsets = [0, 16], sizes = [16, 8], strides = [1, 1]} : vector<16x32xf32> to vector<16x8xf32>
    %95 = vector.extract_strided_slice %60 {offsets = [0, 16], sizes = [8, 8], strides = [1, 1]} : vector<8x32xf32> to vector<8x8xf32>
    %cst_35 = arith.constant dense<0.000000e+00> : vector<16x8xf32>
    %96 = tpu.matmul %94, %95, %cst_35 {dimension_numbers = #tpu.dot_dimension_numbers<[1], [1], [0], [0], [0, 0, 1, 0], [], []>} : vector<16x8xf32>, vector<8x8xf32>, vector<16x8xf32> -> vector<16x8xf32>
    %cst_36 = arith.constant dense<0xFF800000> : vector<16xf32>
    %97 = vector.multi_reduction <maximumf>, %96, %cst_36 [1] : vector<16x8xf32> to vector<16xf32>
    %98 = vector.shape_cast %97 : vector<16xf32> to vector<16x1xf32>
    %99 = vector.broadcast %98 : vector<16x1xf32> to vector<16x8xf32>
    %100 = arith.subf %96, %99 : vector<16x8xf32>
    %101 = math.exp %100 : vector<16x8xf32>
    %cst_37 = arith.constant dense<0.000000e+00> : vector<16xf32>
    %102 = vector.multi_reduction <add>, %101, %cst_37 [1] : vector<16x8xf32> to vector<16xf32>
    %103 = vector.shape_cast %102 : vector<16xf32> to vector<16x1xf32>
    %104 = tpu.reciprocal %103 {approx = true} : vector<16x1xf32> -> vector<16x1xf32>
    %105 = vector.broadcast %104 : vector<16x1xf32> to vector<16x8xf32>
    %106 = arith.mulf %101, %105 : vector<16x8xf32>
    %107 = vector.extract_strided_slice %61 {offsets = [0, 16], sizes = [8, 8], strides = [1, 1]} : vector<8x32xf32> to vector<8x8xf32>
    %cst_38 = arith.constant dense<0.000000e+00> : vector<16x8xf32>
    %108 = tpu.matmul %106, %107, %cst_38 {dimension_numbers = #tpu.dot_dimension_numbers<[1], [0], [0], [1], [0, 0, 1, 1], [], []>} : vector<16x8xf32>, vector<8x8xf32>, vector<16x8xf32> -> vector<16x8xf32>
    %109 = vector.extract_strided_slice %63 {offsets = [0, 24], sizes = [16, 8], strides = [1, 1]} : vector<16x32xf32> to vector<16x8xf32>
    %110 = vector.extract_strided_slice %60 {offsets = [0, 24], sizes = [8, 8], strides = [1, 1]} : vector<8x32xf32> to vector<8x8xf32>
    %cst_39 = arith.constant dense<0.000000e+00> : vector<16x8xf32>
    %111 = tpu.matmul %109, %110, %cst_39 {dimension_numbers = #tpu.dot_dimension_numbers<[1], [1], [0], [0], [0, 0, 1, 0], [], []>} : vector<16x8xf32>, vector<8x8xf32>, vector<16x8xf32> -> vector<16x8xf32>
    %cst_40 = arith.constant dense<0xFF800000> : vector<16xf32>
    %112 = vector.multi_reduction <maximumf>, %111, %cst_40 [1] : vector<16x8xf32> to vector<16xf32>
    %113 = vector.shape_cast %112 : vector<16xf32> to vector<16x1xf32>
    %114 = vector.broadcast %113 : vector<16x1xf32> to vector<16x8xf32>
    %115 = arith.subf %111, %114 : vector<16x8xf32>
    %116 = math.exp %115 : vector<16x8xf32>
    %cst_41 = arith.constant dense<0.000000e+00> : vector<16xf32>
    %117 = vector.multi_reduction <add>, %116, %cst_41 [1] : vector<16x8xf32> to vector<16xf32>
    %118 = vector.shape_cast %117 : vector<16xf32> to vector<16x1xf32>
    %119 = tpu.reciprocal %118 {approx = true} : vector<16x1xf32> -> vector<16x1xf32>
    %120 = vector.broadcast %119 : vector<16x1xf32> to vector<16x8xf32>
    %121 = arith.mulf %116, %120 : vector<16x8xf32>
    %122 = vector.extract_strided_slice %61 {offsets = [0, 24], sizes = [8, 8], strides = [1, 1]} : vector<8x32xf32> to vector<8x8xf32>
    %cst_42 = arith.constant dense<0.000000e+00> : vector<16x8xf32>
    %123 = tpu.matmul %121, %122, %cst_42 {dimension_numbers = #tpu.dot_dimension_numbers<[1], [0], [0], [1], [0, 0, 1, 1], [], []>} : vector<16x8xf32>, vector<8x8xf32>, vector<16x8xf32> -> vector<16x8xf32>
    %124 = tpu.concatenate %78, %93, %108, %123 in 1 : vector<16x8xf32>, vector<16x8xf32>, vector<16x8xf32>, vector<16x8xf32> -> vector<16x32xf32>
    %cst_43 = arith.constant dense<0.000000e+00> : vector<16x32xf32>
    %125 = tpu.matmul %124, %24, %cst_43 {dimension_numbers = #tpu.dot_dimension_numbers<[1], [0], [0], [1], [0, 0, 1, 1], [], []>} : vector<16x32xf32>, vector<32x32xf32>, vector<16x32xf32> -> vector<16x32xf32>
    %126 = vector.broadcast %9 : vector<1x32xf32> to vector<16x32xf32>
    %127 = arith.addf %125, %126 : vector<16x32xf32>
    %c1_i32 = arith.constant 1 : i32
    %128 = tpu.dynamic_rotate %127 by %c1_i32 dim 0 : vector<16x32xf32>, i32 -> vector<16x32xf32>
    %129 = arith.mulf %128, %20 : vector<16x32xf32>
    %c15_i32 = arith.constant 15 : i32
    %130 = tpu.dynamic_rotate %127 by %c15_i32 dim 0 : vector<16x32xf32>, i32 -> vector<16x32xf32>
    %131 = arith.mulf %130, %21 : vector<16x32xf32>
    %cst_44 = arith.constant dense<0.000000e+00> : vector<16x32xf32>
    %132 = tpu.matmul %129, %27, %cst_44 {dimension_numbers = #tpu.dot_dimension_numbers<[1], [0], [0], [1], [0, 0, 1, 1], [], []>} : vector<16x32xf32>, vector<32x32xf32>, vector<16x32xf32> -> vector<16x32xf32>
    %cst_45 = arith.constant dense<0.000000e+00> : vector<16x32xf32>
    %133 = tpu.matmul %127, %28, %cst_45 {dimension_numbers = #tpu.dot_dimension_numbers<[1], [0], [0], [1], [0, 0, 1, 1], [], []>} : vector<16x32xf32>, vector<32x32xf32>, vector<16x32xf32> -> vector<16x32xf32>
    %134 = arith.addf %132, %133 : vector<16x32xf32>
    %cst_46 = arith.constant dense<0.000000e+00> : vector<16x32xf32>
    %135 = tpu.matmul %131, %29, %cst_46 {dimension_numbers = #tpu.dot_dimension_numbers<[1], [0], [0], [1], [0, 0, 1, 1], [], []>} : vector<16x32xf32>, vector<32x32xf32>, vector<16x32xf32> -> vector<16x32xf32>
    %136 = arith.addf %134, %135 : vector<16x32xf32>
    %137 = vector.broadcast %10 : vector<1x32xf32> to vector<16x32xf32>
    %138 = arith.addf %136, %137 : vector<16x32xf32>
    %cst_47 = arith.constant 0.000000e+00 : f32
    %139 = vector.broadcast %cst_47 : f32 to vector<16x32xf32>
    %140 = arith.maximumf %138, %139 : vector<16x32xf32>
    %141 = arith.addf %1, %140 : vector<16x32xf32>
    %cst_48 = arith.constant dense<0.000000e+00> : vector<16xf32>
    %142 = vector.multi_reduction <add>, %140, %cst_48 [1] : vector<16x32xf32> to vector<16xf32>
    %143 = vector.shape_cast %142 : vector<16xf32> to vector<16x1xf32>
    %cst_49 = arith.constant 3.200000e+01 : f32
    %144 = vector.broadcast %cst_49 : f32 to vector<16x1xf32>
    %145 = arith.divf %143, %144 : vector<16x1xf32>
    %146 = arith.mulf %140, %140 : vector<16x32xf32>
    %cst_50 = arith.constant dense<0.000000e+00> : vector<16xf32>
    %147 = vector.multi_reduction <add>, %146, %cst_50 [1] : vector<16x32xf32> to vector<16xf32>
    %148 = vector.shape_cast %147 : vector<16xf32> to vector<16x1xf32>
    %cst_51 = arith.constant 3.200000e+01 : f32
    %149 = vector.broadcast %cst_51 : f32 to vector<16x1xf32>
    %150 = arith.divf %148, %149 : vector<16x1xf32>
    %151 = arith.mulf %145, %145 : vector<16x1xf32>
    %152 = arith.subf %150, %151 : vector<16x1xf32>
    %153 = vector.broadcast %145 : vector<16x1xf32> to vector<16x32xf32>
    %154 = arith.subf %140, %153 : vector<16x32xf32>
    %cst_52 = arith.constant 9.99999974E-6 : f32
    %155 = vector.broadcast %cst_52 : f32 to vector<16x1xf32>
    %156 = arith.addf %152, %155 : vector<16x1xf32>
    %157 = math.rsqrt %156 : vector<16x1xf32>
    %158 = vector.broadcast %157 : vector<16x1xf32> to vector<16x32xf32>
    %159 = arith.mulf %154, %158 : vector<16x32xf32>
    %160 = vector.broadcast %11 : vector<1x32xf32> to vector<16x32xf32>
    %161 = arith.mulf %159, %160 : vector<16x32xf32>
    %162 = vector.broadcast %12 : vector<1x32xf32> to vector<16x32xf32>
    %163 = arith.addf %161, %162 : vector<16x32xf32>
    %cst_53 = arith.constant dense<0.000000e+00> : vector<16x128xf32>
    %164 = tpu.matmul %163, %25, %cst_53 {dimension_numbers = #tpu.dot_dimension_numbers<[1], [0], [0], [1], [0, 0, 1, 1], [], []>} : vector<16x32xf32>, vector<32x128xf32>, vector<16x128xf32> -> vector<16x128xf32>
    %165 = vector.broadcast %13 : vector<1x128xf32> to vector<16x128xf32>
    %166 = arith.addf %164, %165 : vector<16x128xf32>
    %cst_54 = arith.constant 0.000000e+00 : f32
    %167 = vector.broadcast %cst_54 : f32 to vector<16x128xf32>
    %168 = arith.maximumf %166, %167 : vector<16x128xf32>
    %cst_55 = arith.constant dense<0.000000e+00> : vector<16x32xf32>
    %169 = tpu.matmul %168, %26, %cst_55 {dimension_numbers = #tpu.dot_dimension_numbers<[1], [0], [0], [1], [0, 0, 1, 1], [], []>} : vector<16x128xf32>, vector<128x32xf32>, vector<16x32xf32> -> vector<16x32xf32>
    %170 = vector.broadcast %14 : vector<1x32xf32> to vector<16x32xf32>
    %171 = arith.addf %169, %170 : vector<16x32xf32>
    %172 = arith.addf %141, %171 : vector<16x32xf32>
    %cst_56 = arith.constant dense<0.000000e+00> : vector<16xf32>
    %173 = vector.multi_reduction <add>, %172, %cst_56 [1] : vector<16x32xf32> to vector<16xf32>
    %174 = vector.shape_cast %173 : vector<16xf32> to vector<16x1xf32>
    %cst_57 = arith.constant 3.200000e+01 : f32
    %175 = vector.broadcast %cst_57 : f32 to vector<16x1xf32>
    %176 = arith.divf %174, %175 : vector<16x1xf32>
    %177 = arith.mulf %172, %172 : vector<16x32xf32>
    %cst_58 = arith.constant dense<0.000000e+00> : vector<16xf32>
    %178 = vector.multi_reduction <add>, %177, %cst_58 [1] : vector<16x32xf32> to vector<16xf32>
    %179 = vector.shape_cast %178 : vector<16xf32> to vector<16x1xf32>
    %cst_59 = arith.constant 3.200000e+01 : f32
    %180 = vector.broadcast %cst_59 : f32 to vector<16x1xf32>
    %181 = arith.divf %179, %180 : vector<16x1xf32>
    %182 = arith.mulf %176, %176 : vector<16x1xf32>
    %183 = arith.subf %181, %182 : vector<16x1xf32>
    %184 = vector.broadcast %176 : vector<16x1xf32> to vector<16x32xf32>
    %185 = arith.subf %172, %184 : vector<16x32xf32>
    %cst_60 = arith.constant 9.99999974E-6 : f32
    %186 = vector.broadcast %cst_60 : f32 to vector<16x1xf32>
    %187 = arith.addf %183, %186 : vector<16x1xf32>
    %188 = math.rsqrt %187 : vector<16x1xf32>
    %189 = vector.broadcast %188 : vector<16x1xf32> to vector<16x32xf32>
    %190 = arith.mulf %185, %189 : vector<16x32xf32>
    %191 = vector.broadcast %15 : vector<1x32xf32> to vector<16x32xf32>
    %192 = arith.mulf %190, %191 : vector<16x32xf32>
    %193 = vector.broadcast %16 : vector<1x32xf32> to vector<16x32xf32>
    %194 = arith.addf %192, %193 : vector<16x32xf32>
    %cst_61 = arith.constant dense<0.000000e+00> : vector<16x24xf32>
    %195 = tpu.matmul %194, %30, %cst_61 {dimension_numbers = #tpu.dot_dimension_numbers<[1], [0], [0], [1], [0, 0, 1, 1], [], []>} : vector<16x32xf32>, vector<32x24xf32>, vector<16x24xf32> -> vector<16x24xf32>
    %196 = vector.broadcast %17 : vector<1x24xf32> to vector<16x24xf32>
    %197 = arith.addf %195, %196 : vector<16x24xf32>
    %198 = vector.extract_strided_slice %197 {offsets = [0, 0], sizes = [16, 8], strides = [1, 1]} : vector<16x24xf32> to vector<16x8xf32>
    %cst_62 = arith.constant 0.707106769 : f32
    %199 = vector.broadcast %cst_62 : f32 to vector<16x8xf32>
    %200 = arith.mulf %198, %199 : vector<16x8xf32>
    %201 = vector.extract_strided_slice %197 {offsets = [0, 8], sizes = [16, 8], strides = [1, 1]} : vector<16x24xf32> to vector<16x8xf32>
    %202 = vector.extract_strided_slice %197 {offsets = [0, 16], sizes = [16, 8], strides = [1, 1]} : vector<16x24xf32> to vector<16x8xf32>
    %203 = vector.extract_strided_slice %200 {offsets = [0, 0], sizes = [16, 2], strides = [1, 1]} : vector<16x8xf32> to vector<16x2xf32>
    %204 = vector.extract_strided_slice %201 {offsets = [0, 0], sizes = [16, 2], strides = [1, 1]} : vector<16x8xf32> to vector<16x2xf32>
    %cst_63 = arith.constant dense<0.000000e+00> : vector<16x16xf32>
    %205 = tpu.matmul %203, %204, %cst_63 {dimension_numbers = #tpu.dot_dimension_numbers<[1], [1], [0], [0], [0, 0, 1, 0], [], []>} : vector<16x2xf32>, vector<16x2xf32>, vector<16x16xf32> -> vector<16x16xf32>
    %206 = arith.addf %205, %19 : vector<16x16xf32>
    %cst_64 = arith.constant dense<0xFF800000> : vector<16xf32>
    %207 = vector.multi_reduction <maximumf>, %206, %cst_64 [1] : vector<16x16xf32> to vector<16xf32>
    %208 = vector.shape_cast %207 : vector<16xf32> to vector<16x1xf32>
    %209 = vector.broadcast %208 : vector<16x1xf32> to vector<16x16xf32>
    %210 = arith.subf %206, %209 : vector<16x16xf32>
    %211 = math.exp %210 : vector<16x16xf32>
    %cst_65 = arith.constant dense<0.000000e+00> : vector<16xf32>
    %212 = vector.multi_reduction <add>, %211, %cst_65 [1] : vector<16x16xf32> to vector<16xf32>
    %213 = vector.shape_cast %212 : vector<16xf32> to vector<16x1xf32>
    %214 = tpu.reciprocal %213 {approx = true} : vector<16x1xf32> -> vector<16x1xf32>
    %215 = vector.broadcast %214 : vector<16x1xf32> to vector<16x16xf32>
    %216 = arith.mulf %211, %215 : vector<16x16xf32>
    %217 = vector.extract_strided_slice %202 {offsets = [0, 0], sizes = [16, 2], strides = [1, 1]} : vector<16x8xf32> to vector<16x2xf32>
    %cst_66 = arith.constant dense<0.000000e+00> : vector<16x2xf32>
    %218 = tpu.matmul %216, %217, %cst_66 {dimension_numbers = #tpu.dot_dimension_numbers<[1], [0], [0], [1], [0, 0, 1, 1], [], []>} : vector<16x16xf32>, vector<16x2xf32>, vector<16x2xf32> -> vector<16x2xf32>
    %219 = vector.extract_strided_slice %200 {offsets = [0, 2], sizes = [16, 2], strides = [1, 1]} : vector<16x8xf32> to vector<16x2xf32>
    %220 = vector.extract_strided_slice %201 {offsets = [0, 2], sizes = [16, 2], strides = [1, 1]} : vector<16x8xf32> to vector<16x2xf32>
    %cst_67 = arith.constant dense<0.000000e+00> : vector<16x16xf32>
    %221 = tpu.matmul %219, %220, %cst_67 {dimension_numbers = #tpu.dot_dimension_numbers<[1], [1], [0], [0], [0, 0, 1, 0], [], []>} : vector<16x2xf32>, vector<16x2xf32>, vector<16x16xf32> -> vector<16x16xf32>
    %222 = arith.addf %221, %19 : vector<16x16xf32>
    %cst_68 = arith.constant dense<0xFF800000> : vector<16xf32>
    %223 = vector.multi_reduction <maximumf>, %222, %cst_68 [1] : vector<16x16xf32> to vector<16xf32>
    %224 = vector.shape_cast %223 : vector<16xf32> to vector<16x1xf32>
    %225 = vector.broadcast %224 : vector<16x1xf32> to vector<16x16xf32>
    %226 = arith.subf %222, %225 : vector<16x16xf32>
    %227 = math.exp %226 : vector<16x16xf32>
    %cst_69 = arith.constant dense<0.000000e+00> : vector<16xf32>
    %228 = vector.multi_reduction <add>, %227, %cst_69 [1] : vector<16x16xf32> to vector<16xf32>
    %229 = vector.shape_cast %228 : vector<16xf32> to vector<16x1xf32>
    %230 = tpu.reciprocal %229 {approx = true} : vector<16x1xf32> -> vector<16x1xf32>
    %231 = vector.broadcast %230 : vector<16x1xf32> to vector<16x16xf32>
    %232 = arith.mulf %227, %231 : vector<16x16xf32>
    %233 = vector.extract_strided_slice %202 {offsets = [0, 2], sizes = [16, 2], strides = [1, 1]} : vector<16x8xf32> to vector<16x2xf32>
    %cst_70 = arith.constant dense<0.000000e+00> : vector<16x2xf32>
    %234 = tpu.matmul %232, %233, %cst_70 {dimension_numbers = #tpu.dot_dimension_numbers<[1], [0], [0], [1], [0, 0, 1, 1], [], []>} : vector<16x16xf32>, vector<16x2xf32>, vector<16x2xf32> -> vector<16x2xf32>
    %235 = vector.extract_strided_slice %200 {offsets = [0, 4], sizes = [16, 2], strides = [1, 1]} : vector<16x8xf32> to vector<16x2xf32>
    %236 = vector.extract_strided_slice %201 {offsets = [0, 4], sizes = [16, 2], strides = [1, 1]} : vector<16x8xf32> to vector<16x2xf32>
    %cst_71 = arith.constant dense<0.000000e+00> : vector<16x16xf32>
    %237 = tpu.matmul %235, %236, %cst_71 {dimension_numbers = #tpu.dot_dimension_numbers<[1], [1], [0], [0], [0, 0, 1, 0], [], []>} : vector<16x2xf32>, vector<16x2xf32>, vector<16x16xf32> -> vector<16x16xf32>
    %238 = arith.addf %237, %19 : vector<16x16xf32>
    %cst_72 = arith.constant dense<0xFF800000> : vector<16xf32>
    %239 = vector.multi_reduction <maximumf>, %238, %cst_72 [1] : vector<16x16xf32> to vector<16xf32>
    %240 = vector.shape_cast %239 : vector<16xf32> to vector<16x1xf32>
    %241 = vector.broadcast %240 : vector<16x1xf32> to vector<16x16xf32>
    %242 = arith.subf %238, %241 : vector<16x16xf32>
    %243 = math.exp %242 : vector<16x16xf32>
    %cst_73 = arith.constant dense<0.000000e+00> : vector<16xf32>
    %244 = vector.multi_reduction <add>, %243, %cst_73 [1] : vector<16x16xf32> to vector<16xf32>
    %245 = vector.shape_cast %244 : vector<16xf32> to vector<16x1xf32>
    %246 = tpu.reciprocal %245 {approx = true} : vector<16x1xf32> -> vector<16x1xf32>
    %247 = vector.broadcast %246 : vector<16x1xf32> to vector<16x16xf32>
    %248 = arith.mulf %243, %247 : vector<16x16xf32>
    %249 = vector.extract_strided_slice %202 {offsets = [0, 4], sizes = [16, 2], strides = [1, 1]} : vector<16x8xf32> to vector<16x2xf32>
    %cst_74 = arith.constant dense<0.000000e+00> : vector<16x2xf32>
    %250 = tpu.matmul %248, %249, %cst_74 {dimension_numbers = #tpu.dot_dimension_numbers<[1], [0], [0], [1], [0, 0, 1, 1], [], []>} : vector<16x16xf32>, vector<16x2xf32>, vector<16x2xf32> -> vector<16x2xf32>
    %251 = vector.extract_strided_slice %200 {offsets = [0, 6], sizes = [16, 2], strides = [1, 1]} : vector<16x8xf32> to vector<16x2xf32>
    %252 = vector.extract_strided_slice %201 {offsets = [0, 6], sizes = [16, 2], strides = [1, 1]} : vector<16x8xf32> to vector<16x2xf32>
    %cst_75 = arith.constant dense<0.000000e+00> : vector<16x16xf32>
    %253 = tpu.matmul %251, %252, %cst_75 {dimension_numbers = #tpu.dot_dimension_numbers<[1], [1], [0], [0], [0, 0, 1, 0], [], []>} : vector<16x2xf32>, vector<16x2xf32>, vector<16x16xf32> -> vector<16x16xf32>
    %254 = arith.addf %253, %19 : vector<16x16xf32>
    %cst_76 = arith.constant dense<0xFF800000> : vector<16xf32>
    %255 = vector.multi_reduction <maximumf>, %254, %cst_76 [1] : vector<16x16xf32> to vector<16xf32>
    %256 = vector.shape_cast %255 : vector<16xf32> to vector<16x1xf32>
    %257 = vector.broadcast %256 : vector<16x1xf32> to vector<16x16xf32>
    %258 = arith.subf %254, %257 : vector<16x16xf32>
    %259 = math.exp %258 : vector<16x16xf32>
    %cst_77 = arith.constant dense<0.000000e+00> : vector<16xf32>
    %260 = vector.multi_reduction <add>, %259, %cst_77 [1] : vector<16x16xf32> to vector<16xf32>
    %261 = vector.shape_cast %260 : vector<16xf32> to vector<16x1xf32>
    %262 = tpu.reciprocal %261 {approx = true} : vector<16x1xf32> -> vector<16x1xf32>
    %263 = vector.broadcast %262 : vector<16x1xf32> to vector<16x16xf32>
    %264 = arith.mulf %259, %263 : vector<16x16xf32>
    %265 = vector.extract_strided_slice %202 {offsets = [0, 6], sizes = [16, 2], strides = [1, 1]} : vector<16x8xf32> to vector<16x2xf32>
    %cst_78 = arith.constant dense<0.000000e+00> : vector<16x2xf32>
    %266 = tpu.matmul %264, %265, %cst_78 {dimension_numbers = #tpu.dot_dimension_numbers<[1], [0], [0], [1], [0, 0, 1, 1], [], []>} : vector<16x16xf32>, vector<16x2xf32>, vector<16x2xf32> -> vector<16x2xf32>
    %267 = tpu.concatenate %218, %234, %250, %266 in 1 : vector<16x2xf32>, vector<16x2xf32>, vector<16x2xf32>, vector<16x2xf32> -> vector<16x8xf32>
    %cst_79 = arith.constant dense<0.000000e+00> : vector<16x32xf32>
    %268 = tpu.matmul %267, %31, %cst_79 {dimension_numbers = #tpu.dot_dimension_numbers<[1], [0], [0], [1], [0, 0, 1, 1], [], []>} : vector<16x8xf32>, vector<8x32xf32>, vector<16x32xf32> -> vector<16x32xf32>
    %269 = vector.broadcast %18 : vector<1x32xf32> to vector<16x32xf32>
    %270 = arith.addf %268, %269 : vector<16x32xf32>
    %271 = arith.addf %172, %270 : vector<16x32xf32>
    %c0_80 = arith.constant 0 : index
    %c0_81 = arith.constant 0 : index
    %c0_82 = arith.constant 0 : index
    %272 = vector.load %arg4[%c0_80, %c0_81, %c0_82] : memref<1x16x32xf32, #tpu.memory_space<vmem>>, vector<1x16x32xf32>
    %273 = vector.shape_cast %272 : vector<1x16x32xf32> to vector<16x32xf32>
    %274 = vector.shape_cast %271 : vector<16x32xf32> to vector<1x16x32xf32>
    tpu.vector_store %arg4[%c0_80, %c0_81, %c0_82], %274 {strides = array<i32>} : memref<1x16x32xf32, #tpu.memory_space<vmem>>, vector<1x16x32xf32>,
    return
  }
  func.func @transform_0(%arg0: i32) -> (i32, i32, i32) {
    %c0_i32 = arith.constant 0 : i32
    %c0_i32_0 = arith.constant 0 : i32
    %c0_i32_1 = arith.constant 0 : i32
    return %arg0, %c0_i32, %c0_i32_0 : i32, i32, i32
  }
  func.func @transform_1(%arg0: i32) -> (i32, i32, i32) {
    %c0_i32 = arith.constant 0 : i32
    %c0_i32_0 = arith.constant 0 : i32
    %c0_i32_1 = arith.constant 0 : i32
    return %arg0, %c0_i32, %c0_i32_0 : i32, i32, i32
  }
  func.func @transform_2(%arg0: i32) -> (i32, i32) {
    %c0_i32 = arith.constant 0 : i32
    %c0_i32_0 = arith.constant 0 : i32
    %c0_i32_1 = arith.constant 0 : i32
    return %c0_i32, %c0_i32_0 : i32, i32
  }
  func.func @transform_3(%arg0: i32) -> (i32, i32, i32) {
    %c0_i32 = arith.constant 0 : i32
    %c0_i32_0 = arith.constant 0 : i32
    %c0_i32_1 = arith.constant 0 : i32
    return %arg0, %c0_i32, %c0_i32_0 : i32, i32, i32
  }
}

</mosaic_0001>

<llo_original>
// kernel: transformer_decoder_block.1
$region0: #{transformer_decoder_block.1}
  #allocation0 [shape = 'u32[]', space=smem, size = 0x4, offset = 0x4, fixed_abs, tag = 'smem constant byte address 0x4 - core index']
  #allocation1 [shape = 'u32[72,128]{1,0:T(1,128)}', space=vmem, size = 0x9000, scoped, tag = 'internal scratch']
  %s0 = inlined_call_operand.hbm [shape: f32[2,16,32], index: 0, kind: input, shape index: {}]
  %s1 = inlined_call_operand.hbm [shape: f32[2,8,32], index: 1, kind: input, shape index: {}]
  %s2 = inlined_call_operand.hbm [shape: f32[456,128], index: 2, kind: input, shape index: {}]
  %s3 = inlined_call_operand.hbm [shape: f32[2,16,32], index: 3, kind: output, shape index: {}]
  %s4 = sld [smem:[#allocation0]]
  $region57: #{transformer_decoder_block.1} parent=0
    _
  %s6 = ssub.s32 1, %s4
  %s7 = scalar_select 0, %s6, %s4
  $region1: #{transformer_decoder_block.1} parent=0
    #allocation2 [shape = 'u8[16384]{0}', space=vmem, size = 0x4000, scoped, tag = 'input window, operand 0']
    #allocation3 [shape = 's32[2]{0}', space=sflag, size = 0x8, scoped, tag = 'scoped memory for transformer_decoder_block.1']
    #allocation4 [shape = 's32[2]{0}', space=sflag, size = 0x8, scoped, tag = 'scoped memory for transformer_decoder_block.1']
    #allocation5 [shape = 'u8[8192]{0}', space=vmem, size = 0x2000, scoped, tag = 'input window, operand 1']
    #allocation6 [shape = 's32[2]{0}', space=sflag, size = 0x8, scoped, tag = 'scoped memory for transformer_decoder_block.1']
    #allocation7 [shape = 'u8[233472]{0}', space=vmem, size = 0x39000, scoped, tag = 'input window, operand 2, single buffered']
    #allocation8 [shape = 'u8[16384]{0}', space=vmem, size = 0x4000, scoped, tag = 'output window, operand 0']
    %8 = vsyncpa [#allocation3], 0
    %s9 = scalar_lea.sflag [#allocation3], 1
    %10 = vsyncpa %s9, 0
    %11 = vsyncpa [#allocation6], 0
    %s12 = scalar_lea.sflag [#allocation6], 1
    %13 = vsyncpa %s12, 0
    %14 = vsyncpa [#allocation4], 0
    %s15 = scalar_lea.sflag [#allocation4], 1
    %16 = vsyncpa %s15, 0
    loop: start=0, step=1, limit=4
    $region2: #{transformer_decoder_block.1} parent=1 // loop_pre_header
      _
    $region3: #{transformer_decoder_block.1} parent=1 // loop_header
      %s18 = sphi 0, %s22
      %p19 = scmp.ge.s32.totalorder %s18, 4
      %s28 = sphi 0, %s30
      %s31 = sphi 0, %s28
      %s32 = sphi 0, %s31
      %s48 = sphi 0, %s32
      %s54 = sphi 0, %s56
      %s57 = sphi 0, %s54
      %s58 = sphi 0, %s57
      %s74 = sphi 0, %s58
      %s78 = sphi 0, %s78
      %s80 = sphi 0, %s78
      %s81 = sphi 0, %s80
      %s95 = sphi 0, %s81
      %s101 = sphi 0, %s103
      %s104 = sphi 0, %s101
      %s105 = sphi 0, %s104
      %s121 = sphi 0, %s105
    $region4: #{transformer_decoder_block.1} parent=1 // loop_header_branch
      %21 = sbr.rel (%p19) target = $region8
    $region5: #{transformer_decoder_block.1} parent=1 // loop_body
      %s23 = ssub.s32 %s18, 1
      %s24 = ssub.s32 %s18, 2
      %s25 = sadd.s32 %s18, 1
      %s26 = ssub.s32 %s18, %s25
      %p27 = scmp.eq.s32.totalorder %s26, 0
      %s29 = sadd.s32 %s28, 1
      %s30 = scalar_select %p27, %s28, %s29
      %p33 = pneg %p27
      %p34 = scmp.eq.s32.totalorder %s18, 1
      %p35 = por %p33, %p34
      %p36 = scmp.ne.s32.totalorder %s28, %s31
      %p37 = scmp.eq.s32.totalorder %s18, 0
      %p38 = por %p36, %p37
      %p39 = scmp.ne.s32.totalorder %s28, %s31
      %p40 = scmp.eq.s32.totalorder %s23, 1
      %p41 = por %p39, %p40
      %p42 = scmp.ne.s32.totalorder %s31, %s32
      %p43 = scmp.eq.s32.totalorder %s23, 0
      %p44 = por %p42, %p43
      %p45 = scmp.ne.s32.totalorder %s31, %s32
      %p46 = scmp.eq.s32.totalorder %s24, 1
      %p47 = por %p45, %p46
      %p49 = scmp.ne.s32.totalorder %s32, %s48
      %p50 = scmp.eq.s32.totalorder %s24, 0
      %p51 = por %p49, %p50
      %s52 = ssub.s32 %s18, %s25
      %p53 = scmp.eq.s32.totalorder %s52, 0
      %s55 = sadd.s32 %s54, 1
      %s56 = scalar_select %p53, %s54, %s55
      %p59 = pneg %p53
      %p60 = scmp.eq.s32.totalorder %s18, 1
      %p61 = por %p59, %p60
      %p62 = scmp.ne.s32.totalorder %s54, %s57
      %p63 = scmp.eq.s32.totalorder %s18, 0
      %p64 = por %p62, %p63
      %p65 = scmp.ne.s32.totalorder %s54, %s57
      %p66 = scmp.eq.s32.totalorder %s23, 1
      %p67 = por %p65, %p66
      %p68 = scmp.ne.s32.totalorder %s57, %s58
      %p69 = scmp.eq.s32.totalorder %s23, 0
      %p70 = por %p68, %p69
      %p71 = scmp.ne.s32.totalorder %s57, %s58
      %p72 = scmp.eq.s32.totalorder %s24, 1
      %p73 = por %p71, %p72
      %p75 = scmp.ne.s32.totalorder %s58, %s74
      %p76 = scmp.eq.s32.totalorder %s24, 0
      %p77 = por %p75, %p76
      %s79 = sadd.s32 %s78, 1
      %p82 = scmp.eq.s32.totalorder %s18, 1
      %p83 = scmp.ne.s32.totalorder %s78, %s80
      %p84 = scmp.eq.s32.totalorder %s18, 0
      %p85 = por %p83, %p84
      %p86 = scmp.ne.s32.totalorder %s78, %s80
      %p87 = scmp.eq.s32.totalorder %s23, 1
      %p88 = por %p86, %p87
      %p89 = scmp.ne.s32.totalorder %s80, %s81
      %p90 = scmp.eq.s32.totalorder %s23, 0
      %p91 = por %p89, %p90
      %p92 = scmp.ne.s32.totalorder %s80, %s81
      %p93 = scmp.eq.s32.totalorder %s24, 1
      %p94 = por %p92, %p93
      %p96 = scmp.ne.s32.totalorder %s81, %s95
      %p97 = scmp.eq.s32.totalorder %s24, 0
      %p98 = por %p96, %p97
      %s99 = ssub.s32 %s18, %s25
      %p100 = scmp.eq.s32.totalorder %s99, 0
      %s102 = sadd.s32 %s101, 1
      %s103 = scalar_select %p100, %s101, %s102
      %p106 = pneg %p100
      %p107 = scmp.eq.s32.totalorder %s18, 1
      %p108 = por %p106, %p107
      %p109 = scmp.ne.s32.totalorder %s101, %s104
      %p110 = scmp.eq.s32.totalorder %s18, 0
      %p111 = por %p109, %p110
      %p112 = scmp.ne.s32.totalorder %s101, %s104
      %p113 = scmp.eq.s32.totalorder %s23, 1
      %p114 = por %p112, %p113
      %p115 = scmp.ne.s32.totalorder %s104, %s105
      %p116 = scmp.eq.s32.totalorder %s23, 0
      %p117 = por %p115, %p116
      %p118 = scmp.ne.s32.totalorder %s104, %s105
      %p119 = scmp.eq.s32.totalorder %s24, 1
      %p120 = por %p118, %p119
      %p122 = scmp.ne.s32.totalorder %s105, %s121
      %p123 = scmp.eq.s32.totalorder %s24, 0
      %p124 = por %p122, %p123
      %p125 = scmp.le.s32.totalorder 1, %s18
      %p126 = scmp.lt.s32.totalorder %s18, 3
      %p127 = pnand %p125, %p126
      %p128 = pneg %p127
      // Predicated region
      $region9: #{transformer_decoder_block.1} parent=5 // pred_check
        _
      $region10: #{transformer_decoder_block.1} parent=5 // pred_check_branch
        %130 = sbr.rel (%p127) target = $region12
      $region11: #{transformer_decoder_block.1} parent=5 // pred_region
        %s131 = ssub.s32 %s18, 1
        // Predicated region
        $region13: #{transformer_decoder_block.1} parent=11 // pred_check
          %p132 = pneg %p91
        $region14: #{transformer_decoder_block.1} parent=11 // pred_check_branch
          %134 = sbr.rel (%p132) target = $region16
        $region15: #{transformer_decoder_block.1} parent=11 // pred_region
          %136 = vsyncadd [#allocation6], 0
          %s137 = sshll.u32 %s2, 4
          %s138 = int_to_ptr.hbm [resolvable:$true] %s137
          %s139 = sshll.u32 [#allocation7], 4
          %s140 = int_to_ptr.vmem [resolvable:$true] %s139
          %145 = dma.hbm_to_vmem [thread:$0]  %s138, 7296, %s140, [#allocation6], 128, 128, 8
        $region16: #{transformer_decoder_block.1} parent=11 // pred_fallthru
          _
      $region12: #{transformer_decoder_block.1} parent=5 // pred_fallthru
        _
      %p146 = scmp.lt.s32.totalorder %s18, 2
      // Predicated region
      $region17: #{transformer_decoder_block.1} parent=5 // pred_check
        %p147 = pneg %p146
      $region18: #{transformer_decoder_block.1} parent=5 // pred_check_branch
        %149 = sbr.rel (%p147) target = $region20
      $region19: #{transformer_decoder_block.1} parent=5 // pred_region
        // Predicated region
        $region21: #{transformer_decoder_block.1} parent=19 // pred_check
          %p150 = pneg %p38
        $region22: #{transformer_decoder_block.1} parent=19 // pred_check_branch
          %152 = sbr.rel (%p150) target = $region24
        $region23: #{transformer_decoder_block.1} parent=19 // pred_region
          %s153 = sand.u32 %s28, 1
          %s154 = scalar_lea.sflag [#allocation3], %s153
          %s155 = sand.u32 %s28, 1
          %s156 = smul.addr %s155, 16
          %s157 = scalar_lea.vmem [#allocation2], %s156
          %159 = vsyncadd %s154, 0
          %s160 = smul.addr %s18, 2
          %s161 = smul.addr %s160, 8
          %s162 = scalar_lea.hbm %s0, %s161
          %s163 = sshll.u32 %s162, 4
          %s164 = int_to_ptr.hbm [resolvable:$true] %s163
          %s165 = sshll.u32 %s157, 4
          %s166 = int_to_ptr.vmem [resolvable:$true] %s165
          %171 = dma.hbm_to_vmem [thread:$0]  %s164, 256, %s166, %s154, 128, 128, 8
        $region24: #{transformer_decoder_block.1} parent=19 // pred_fallthru
          _
        // Predicated region
        $region25: #{transformer_decoder_block.1} parent=19 // pred_check
          %p172 = pneg %p64
        $region26: #{transformer_decoder_block.1} parent=19 // pred_check_branch
          %174 = sbr.rel (%p172) target = $region28
        $region27: #{transformer_decoder_block.1} parent=19 // pred_region
          %s175 = sand.u32 %s18, 1
          %s176 = scalar_lea.sflag [#allocation6], %s175
          %s177 = sand.u32 %s54, 1
          %s178 = smul.addr %s177, 8
          %s179 = scalar_lea.vmem [#allocation5], %s178
          %181 = vsyncadd %s176, 0
          %s182 = smul.addr %s18, 8
          %s183 = scalar_lea.hbm %s1, %s182
          %s185 = sshll.u32 %s183, 4
          %s186 = int_to_ptr.hbm [resolvable:$true] %s185
          %s187 = sshll.u32 %s179, 4
          %s188 = int_to_ptr.vmem [resolvable:$true] %s187
          %190 = dma.hbm_to_vmem [thread:$0]  %s186, 128, %s188, %s176
        $region28: #{transformer_decoder_block.1} parent=19 // pred_fallthru
          _
      $region20: #{transformer_decoder_block.1} parent=5 // pred_fallthru
        _
      %p191 = scmp.le.s32.totalorder 1, %s18
      %p192 = scmp.lt.s32.totalorder %s18, 3
      %p193 = pnand %p191, %p192
      %p194 = pneg %p193
      // Predicated region
      $region29: #{transformer_decoder_block.1} parent=5 // pred_check
        _
      $region30: #{transformer_decoder_block.1} parent=5 // pred_check_branch
        %196 = sbr.rel (%p193) target = $region32
      $region31: #{transformer_decoder_block.1} parent=5 // pred_region
        %s197 = ssub.s32 %s18, 1
        %s198 = sand.u32 %s31, 1
        %s199 = scalar_lea.sflag [#allocation3], %s198
        %s200 = sand.u32 %s31, 1
        %s201 = smul.addr %s200, 16
        %s202 = scalar_lea.vmem [#allocation2], %s201
        // Predicated region
        $region33: #{transformer_decoder_block.1} parent=31 // pred_check
          %p203 = pneg %p44
        $region34: #{transformer_decoder_block.1} parent=31 // pred_check_branch
          %205 = sbr.rel (%p203) target = $region36
        $region35: #{transformer_decoder_block.1} parent=31 // pred_region
          %207 = dma.done %s199, 256
        $region36: #{transformer_decoder_block.1} parent=31 // pred_fallthru
          _
        %s208 = sand.u32 %s23, 1
        %s209 = scalar_lea.sflag [#allocation6], %s208
        %s210 = sand.u32 %s57, 1
        %s211 = smul.addr %s210, 8
        %s212 = scalar_lea.vmem [#allocation5], %s211
        // Predicated region
        $region37: #{transformer_decoder_block.1} parent=31 // pred_check
          %p213 = pneg %p70
        $region38: #{transformer_decoder_block.1} parent=31 // pred_check_branch
          %215 = sbr.rel (%p213) target = $region40
        $region39: #{transformer_decoder_block.1} parent=31 // pred_region
          %217 = dma.done %s209, 128
        $region40: #{transformer_decoder_block.1} parent=31 // pred_fallthru
          _
        // Predicated region
        $region41: #{transformer_decoder_block.1} parent=31 // pred_check
          %p218 = pneg %p91
        $region42: #{transformer_decoder_block.1} parent=31 // pred_check_branch
          %220 = sbr.rel (%p218) target = $region44
        $region43: #{transformer_decoder_block.1} parent=31 // pred_region
          %222 = dma.done [#allocation6], 7296
        $region44: #{transformer_decoder_block.1} parent=31 // pred_fallthru
          _
        %s223 = sand.u32 %s31, 1
        %s224 = scalar_lea.sflag [#allocation3], %s223
        %s225 = sand.u32 %s31, 1
        %s226 = smul.addr %s225, 16
        %s227 = scalar_lea.vmem [#allocation2], %s226
        %p228 = pneg %p44
        %p229 = pneg %p41
        %s230 = sand.u32 %s23, 1
        %s231 = scalar_lea.sflag [#allocation6], %s230
        %s232 = sand.u32 %s57, 1
        %s233 = smul.addr %s232, 8
        %s234 = scalar_lea.vmem [#allocation5], %s233
        %p235 = pneg %p70
        %p236 = pneg %p67
        %p237 = pneg %p91
        %p238 = pneg %p88
        %p239 = pneg %p117
        %p240 = pneg %p114
        %s241 = sand.u32 %s104, 1
        %s242 = scalar_lea.sflag [#allocation4], %s241
        %s243 = sand.u32 %s104, 1
        %s244 = smul.addr %s243, 16
        %s245 = scalar_lea.vmem [#allocation8], %s244
        %v246 = vld [vmem:[%s202] sm:$0xff]
        %v247 = vld [vmem:[%s202 + $0x8] sm:$0xff]
        %v248 = vld [vmem:[%s212] sm:$0xff]
        %v249 = vld [vmem:[#allocation7] sm:$0xff]
        %v250 = vld [vmem:[#allocation7 + $0x8] sm:$0xff]
        %v251 = vld [vmem:[#allocation7 + $0x10] sm:$0xff]
        %v252 = vld [vmem:[#allocation7 + $0x18] sm:$0xff]
        %v253 = vld [vmem:[#allocation7 + $0x20] sm:$0xff]
        %v254 = vld [vmem:[#allocation7 + $0x28] sm:$0xff]
        %v255 = vld [vmem:[#allocation7 + $0x30] sm:$0xff]
        %v256 = vld [vmem:[#allocation7 + $0x38] sm:$0xff]
        %v257 = vld [vmem:[#allocation7 + $0x40] sm:$0xff]
        %v258 = vld [vmem:[#allocation7 + $0x48] sm:$0xff]
        %v259 = vld [vmem:[#allocation7 + $0x50] sm:$0xff]
        %v260 = vld [vmem:[#allocation7 + $0x58] sm:$0xff]
        %v261 = vld [vmem:[#allocation7 + $0x60] sm:$0xff]
        %v262 = vld [vmem:[#allocation7 + $0x68] sm:$0xff]
        %v263 = vld [vmem:[#allocation7 + $0x70] sm:$0xff]
        %v264 = vld [vmem:[#allocation7 + $0x78] sm:$0xff]
        %v265 = vld [vmem:[#allocation7 + $0x80] sm:$0xff]
        %v266 = vld [vmem:[#allocation7 + $0x88] sm:$0xff]
        %v267 = vld [vmem:[#allocation7 + $0x90] sm:$0xff]
        %v268 = vld [vmem:[#allocation7 + $0x98] sm:$0xff]
        %v269 = vld [vmem:[#allocation7 + $0xa0] sm:$0xff]
        %v270 = vld [vmem:[#allocation7 + $0xa8] sm:$0xff]
        %v271 = vld [vmem:[#allocation7 + $0xb0] sm:$0xff]
        %v272 = vld [vmem:[#allocation7 + $0xb8] sm:$0xff]
        %v273 = vld [vmem:[#allocation7 + $0xc0] sm:$0xff]
        %v274 = vld [vmem:[#allocation7 + $0xc8] sm:$0xff]
        %v275 = vld [vmem:[#allocation7 + $0xd0] sm:$0xff]
        %v276 = vld [vmem:[#allocation7 + $0xd8] sm:$0xff]
        %v277 = vld [vmem:[#allocation7 + $0xe0] sm:$0xff]
        %v278 = vld [vmem:[#allocation7 + $0xe8] sm:$0xff]
        %v279 = vld [vmem:[#allocation7 + $0xf0] sm:$0xff]
        %v280 = vld [vmem:[#allocation7 + $0xf8] sm:$0xff]
        %v281 = vld [vmem:[#allocation7 + $0x100] sm:$0xff]
        %v282 = vld [vmem:[#allocation7 + $0x108] sm:$0xff]
        %v283 = vld [vmem:[#allocation7 + $0x110] sm:$0xff]
        %v284 = vld [vmem:[#allocation7 + $0x118] sm:$0xff]
        %v285 = vld [vmem:[#allocation7 + $0x120] sm:$0xff]
        %v286 = vld [vmem:[#allocation7 + $0x128] sm:$0xff]
        %v287 = vld [vmem:[#allocation7 + $0x130] sm:$0xff]
        %v288 = vld [vmem:[#allocation7 + $0x138] sm:$0xff]
        %v289 = vld [vmem:[#allocation7 + $0x140] sm:$0xff]
        %v290 = vld [vmem:[#allocation7 + $0x148] sm:$0xff]
        %v291 = vld [vmem:[#allocation7 + $0x150] sm:$0xff]
        %v292 = vld [vmem:[#allocation7 + $0x158] sm:$0xff]
        %v293 = vld [vmem:[#allocation7 + $0x160] sm:$0xff]
        %v294 = vld [vmem:[#allocation7 + $0x168] sm:$0xff]
        %v295 = vld [vmem:[#allocation7 + $0x170] sm:$0xff]
        %v296 = vld [vmem:[#allocation7 + $0x178] sm:$0xff]
        %v297 = vld [vmem:[#allocation7 + $0x180] sm:$0xff]
        %v298 = vld [vmem:[#allocation7 + $0x188] sm:$0xff]
        %v299 = vld [vmem:[#allocation7 + $0x190] sm:$0xff]
        %v300 = vld [vmem:[#allocation7 + $0x198] sm:$0xff]
        %v301 = vld [vmem:[#allocation7 + $0x1a0] sm:$0xff]
        %v302 = vld [vmem:[#allocation7 + $0x1a8] sm:$0xff]
        %v303 = vld [vmem:[#allocation7 + $0x1b0] sm:$0xff]
        %v304 = vld [vmem:[#allocation7 + $0x1b8] sm:$0xff]
        %v305 = vld [vmem:[#allocation7 + $0x1c0] sm:$0xff]
        %vm306 = vcmask 261120
        %v307 = vsel %vm306, %v246, 0.0
        %308 = vadd.xlane.f32.xlu0 %v307
        %v309 = vpop.xlane.xlu0 %308
        %v310 = vsel %vm306, %v247, 0.0
        %311 = vadd.xlane.f32.xlu0 %v310
        %v312 = vpop.xlane.xlu0 %311
        %v313 = vrcp.pop 32.0
        %v314 = vmul.f32 32.0, %v313
        %v315 = vsub.f32 1.0, %v314
        %v316 = vmul.f32 %v313, %v315
        %v317 = vadd.f32 %v313, %v316
        %vm318 = vweird.f32 %v313
        %v319 = vsel %vm318, %v313, %v317
        %v320 = vmul.f32 %v309, %v319
        %v321 = vmul.f32 %v312, %v319
        %v322 = vmul.f32 %v246, %v246
        %v323 = vmul.f32 %v247, %v247
        %v324 = vsel %vm306, %v322, 0.0
        %325 = vadd.xlane.f32.xlu0 %v324
        %v326 = vpop.xlane.xlu0 %325
        %v327 = vsel %vm306, %v323, 0.0
        %328 = vadd.xlane.f32.xlu0 %v327
        %v329 = vpop.xlane.xlu0 %328
        %v330 = vmul.f32 %v326, %v319
        %v331 = vmul.f32 %v329, %v319
        %v332 = vmul.f32 %v320, %v320
        %v333 = vmul.f32 %v321, %v321
        %v334 = vsub.f32 %v330, %v332
        %v335 = vsub.f32 %v331, %v333
        %v336 = vsub.f32 %v246, %v320
        %v337 = vsub.f32 %v247, %v321
        %v338 = vadd.f32 %v334, 1e-05
        %v339 = vadd.f32 %v335, 1e-05
        %v340 = vrsqrt.pop %v338
        %v341 = vmul.f32 %v340, %v338
        %v342 = vmul.f32 %v341, %v340
        %v343 = vmul.f32 0.5, %v342
        %v344 = vsub.f32 1.5, %v343
        %v345 = vmul.f32 %v340, %v344
        %vm346 = vweird.f32 %v338
        %vm347 = vweird.f32 %v340
        %vm348 = vmor %vm346, %vm347
        %v349 = vsel %vm348, %v340, %v345
        %v350 = vrsqrt.pop %v339
        %v351 = vmul.f32 %v350, %v339
        %v352 = vmul.f32 %v351, %v350
        %v353 = vmul.f32 0.5, %v352
        %v354 = vsub.f32 1.5, %v353
        %v355 = vmul.f32 %v350, %v354
        %vm356 = vweird.f32 %v339
        %vm357 = vweird.f32 %v350
        %vm358 = vmor %vm356, %vm357
        %v359 = vsel %vm358, %v350, %v355
        %v360 = vmul.f32 %v336, %v349
        %v361 = vmul.f32 %v337, %v359
        %v362 = vperm.slane %v249, 0
        %v363 = vmul.f32 %v360, %v362
        %v364 = vmul.f32 %v361, %v362
        %v365 = vperm.slane %v249, 1
        %v366 = vadd.f32 %v363, %v365
        %v367 = vadd.f32 %v364, %v365
        %v368 = vperm.slane %v249, 2
        %v370 = vsel %vm306, %v366, 0
        %v373 = vsel %vm306, %v367, 0
        %375 = vmatpush.msra.mxu0 0.0
        %376 = vmatpush.msra.mxu0 0.0
        %377 = vmatpush.msra.mxu0 0.0
        %378 = vmatpush.msra.mxu0 0.0
        %379 = vmatpush.msra.mxu0 0.0
        %380 = vmatpush.msra.mxu0 0.0
        %381 = vmatpush.msra.mxu0 0.0
        %382 = vmatpush.msra.mxu0 0.0
        %383 = vmatpush.msra.mxu0 0.0
        %384 = vmatpush.msra.mxu0 0.0
        %385 = vmatpush.msra.mxu0 0.0
        %386 = vmatpush.msra.mxu0 0.0
        %387 = vmatpush.msra.mxu0 %v260
        %388 = vmatpush.msra.mxu0 %v259
        %389 = vmatpush.msra.mxu0 %v258
        %390 = vmatpush.msra.mxu0 %v257
        %391 = vmatmul.f32.gmra.mxu0 %v370
        %v392 = vpop.f32.mrf.mxu0
        %v393 = vadd.f32 %v368, %v392
        %394 = vmatmul.f32.gmra.mxu0 %v373
        %v395 = vpop.f32.mrf.mxu0
        %v396 = vadd.f32 %v368, %v395
        %397 = vdwg.mxu0
        %v398 = vperm.slane %v249, 3
        %v400 = vsel %vm306, %v248, 0
        %402 = vmatpush.msra.mxu0 0.0
        %403 = vmatpush.msra.mxu0 0.0
        %404 = vmatpush.msra.mxu0 0.0
        %405 = vmatpush.msra.mxu0 0.0
        %406 = vmatpush.msra.mxu0 0.0
        %407 = vmatpush.msra.mxu0 0.0
        %408 = vmatpush.msra.mxu0 0.0
        %409 = vmatpush.msra.mxu0 0.0
        %410 = vmatpush.msra.mxu0 0.0
        %411 = vmatpush.msra.mxu0 0.0
        %412 = vmatpush.msra.mxu0 0.0
        %413 = vmatpush.msra.mxu0 0.0
        %414 = vmatpush.msra.mxu0 %v264
        %415 = vmatpush.msra.mxu0 %v263
        %416 = vmatpush.msra.mxu0 %v262
        %417 = vmatpush.msra.mxu0 %v261
        %418 = vmatmul.f32.gmra.mxu0 %v400
        %v419 = vpop.f32.mrf.mxu0
        %v420 = vadd.f32 %v398, %v419
        %421 = vdwg.mxu0
        %v422 = vmul.f32 %v393, 0.35355338
        %v423 = vmul.f32 %v396, 0.35355338
        %vm424 = vcmask 64512
        %v426 = vsel %vm424, %v422, 0
        %v429 = vsel %vm424, %v423, 0
        %v432 = vsel %vm424, %v420, 0
        %434 = vmatpush.xpose.msra.mxu0 0.0
        %435 = vmatpush.xpose.msra.mxu0 0.0
        %436 = vmatpush.xpose.msra.mxu0 0.0
        %437 = vmatpush.xpose.msra.mxu0 0.0
        %438 = vmatpush.xpose.msra.mxu0 0.0
        %439 = vmatpush.xpose.msra.mxu0 0.0
        %440 = vmatpush.xpose.msra.mxu0 0.0
        %441 = vmatpush.xpose.msra.mxu0 0.0
        %442 = vmatpush.xpose.msra.mxu0 0.0
        %443 = vmatpush.xpose.msra.mxu0 0.0
        %444 = vmatpush.xpose.msra.mxu0 0.0
        %445 = vmatpush.xpose.msra.mxu0 0.0
        %446 = vmatpush.xpose.msra.mxu0 0.0
        %447 = vmatpush.xpose.msra.mxu0 0.0
        %448 = vmatpush.xpose.msra.mxu0 0.0
        %449 = vmatpush.xpose.msra.mxu0 %v432
        %450 = vmatmul.f32.gmra.mxu0 %v426
        %v451 = vpop.f32.mrf.mxu0
        %v452 = vadd.f32 0.0, %v451
        %453 = vmatmul.f32.gmra.mxu0 %v429
        %v454 = vpop.f32.mrf.mxu0
        %v455 = vadd.f32 0.0, %v454
        %456 = vdwg.mxu0
        %v457 = vsel %vm424, %v452, -inf
        %458 = vmax.xlane.f32.xlu0 %v457
        %v459 = vpop.xlane.xlu0 %458
        %v460 = vsel %vm424, %v455, -inf
        %461 = vmax.xlane.f32.xlu0 %v460
        %v462 = vpop.xlane.xlu0 %461
        %v463 = vsub.f32 %v452, %v459
        %v464 = vsub.f32 %v455, %v462
        %v465 = vmul.f32 %v463, 1.442695
        %v466 = vpow.pop %v465
        %v467 = vmul.f32 %v464, 1.442695
        %v468 = vpow.pop %v467
        %v469 = vsel %vm424, %v466, 0.0
        %470 = vadd.xlane.f32.xlu0 %v469
        %v471 = vpop.xlane.xlu0 %470
        %v472 = vsel %vm424, %v468, 0.0
        %473 = vadd.xlane.f32.xlu0 %v472
        %v474 = vpop.xlane.xlu0 %473
        %v475 = vrcp.pop %v471
        %v476 = vrcp.pop %v474
        %v477 = vmul.f32 %v466, %v475
        %v478 = vmul.f32 %v468, %v476
        %479 = vrot.lane.b32.xlu0 %v420, 96
        %v480 = vpop.permute.xlu0 %479
        %v483 = vsel %vm424, %v477, 0
        %v486 = vsel %vm424, %v478, 0
        %488 = vmatpush.msra.mxu0 0.0
        %489 = vmatpush.msra.mxu0 0.0
        %490 = vmatpush.msra.mxu0 0.0
        %491 = vmatpush.msra.mxu0 0.0
        %492 = vmatpush.msra.mxu0 0.0
        %493 = vmatpush.msra.mxu0 0.0
        %494 = vmatpush.msra.mxu0 0.0
        %495 = vmatpush.msra.mxu0 0.0
        %496 = vmatpush.msra.mxu0 0.0
        %497 = vmatpush.msra.mxu0 0.0
        %498 = vmatpush.msra.mxu0 0.0
        %499 = vmatpush.msra.mxu0 0.0
        %500 = vmatpush.msra.mxu0 0.0
        %501 = vmatpush.msra.mxu0 0.0
        %502 = vmatpush.msra.mxu0 0.0
        %503 = vmatpush.msra.mxu0 %v480
        %504 = vmatmul.f32.gmra.mxu0 %v483
        %v505 = vpop.f32.mrf.mxu0
        %v506 = vadd.f32 0.0, %v505
        %507 = vmatmul.f32.gmra.mxu0 %v486
        %v508 = vpop.f32.mrf.mxu0
        %v509 = vadd.f32 0.0, %v508
        %510 = vdwg.mxu0
        %511 = vrot.lane.b32.xlu0 %v422, 120
        %v512 = vpop.permute.xlu0 %511
        %513 = vrot.lane.b32.xlu0 %v423, 120
        %v514 = vpop.permute.xlu0 %513
        %515 = vrot.lane.b32.xlu0 %v420, 120
        %v516 = vpop.permute.xlu0 %515
        %v517 = vsel %vm424, %v512, 0
        %v519 = vsel %vm424, %v514, 0
        %v521 = vsel %vm424, %v516, 0
        %523 = vmatpush.xpose.msra.mxu0 0.0
        %524 = vmatpush.xpose.msra.mxu0 0.0
        %525 = vmatpush.xpose.msra.mxu0 0.0
        %526 = vmatpush.xpose.msra.mxu0 0.0
        %527 = vmatpush.xpose.msra.mxu0 0.0
        %528 = vmatpush.xpose.msra.mxu0 0.0
        %529 = vmatpush.xpose.msra.mxu0 0.0
        %530 = vmatpush.xpose.msra.mxu0 0.0
        %531 = vmatpush.xpose.msra.mxu0 0.0
        %532 = vmatpush.xpose.msra.mxu0 0.0
        %533 = vmatpush.xpose.msra.mxu0 0.0
        %534 = vmatpush.xpose.msra.mxu0 0.0
        %535 = vmatpush.xpose.msra.mxu0 0.0
        %536 = vmatpush.xpose.msra.mxu0 0.0
        %537 = vmatpush.xpose.msra.mxu0 0.0
        %538 = vmatpush.xpose.msra.mxu0 %v521
        %539 = vmatmul.f32.gmra.mxu0 %v517
        %v540 = vpop.f32.mrf.mxu0
        %v541 = vadd.f32 0.0, %v540
        %542 = vmatmul.f32.gmra.mxu0 %v519
        %v543 = vpop.f32.mrf.mxu0
        %v544 = vadd.f32 0.0, %v543
        %545 = vdwg.mxu0
        %v546 = vsel %vm424, %v541, -inf
        %547 = vmax.xlane.f32.xlu0 %v546
        %v548 = vpop.xlane.xlu0 %547
        %v549 = vsel %vm424, %v544, -inf
        %550 = vmax.xlane.f32.xlu0 %v549
        %v551 = vpop.xlane.xlu0 %550
        %v552 = vsub.f32 %v541, %v548
        %v553 = vsub.f32 %v544, %v551
        %v554 = vmul.f32 %v552, 1.442695
        %v555 = vpow.pop %v554
        %v556 = vmul.f32 %v553, 1.442695
        %v557 = vpow.pop %v556
        %v558 = vsel %vm424, %v555, 0.0
        %559 = vadd.xlane.f32.xlu0 %v558
        %v560 = vpop.xlane.xlu0 %559
        %v561 = vsel %vm424, %v557, 0.0
        %562 = vadd.xlane.f32.xlu0 %v561
        %v563 = vpop.xlane.xlu0 %562
        %v564 = vrcp.pop %v560
        %v565 = vrcp.pop %v563
        %v566 = vmul.f32 %v555, %v564
        %v567 = vmul.f32 %v557, %v565
        %568 = vrot.lane.b32.xlu0 %v420, 88
        %v569 = vpop.permute.xlu0 %568
        %v572 = vsel %vm424, %v566, 0
        %v575 = vsel %vm424, %v567, 0
        %577 = vmatpush.msra.mxu0 0.0
        %578 = vmatpush.msra.mxu0 0.0
        %579 = vmatpush.msra.mxu0 0.0
        %580 = vmatpush.msra.mxu0 0.0
        %581 = vmatpush.msra.mxu0 0.0
        %582 = vmatpush.msra.mxu0 0.0
        %583 = vmatpush.msra.mxu0 0.0
        %584 = vmatpush.msra.mxu0 0.0
        %585 = vmatpush.msra.mxu0 0.0
        %586 = vmatpush.msra.mxu0 0.0
        %587 = vmatpush.msra.mxu0 0.0
        %588 = vmatpush.msra.mxu0 0.0
        %589 = vmatpush.msra.mxu0 0.0
        %590 = vmatpush.msra.mxu0 0.0
        %591 = vmatpush.msra.mxu0 0.0
        %592 = vmatpush.msra.mxu0 %v569
        %593 = vmatmul.f32.gmra.mxu0 %v572
        %v594 = vpop.f32.mrf.mxu0
        %v595 = vadd.f32 0.0, %v594
        %596 = vmatmul.f32.gmra.mxu0 %v575
        %v597 = vpop.f32.mrf.mxu0
        %v598 = vadd.f32 0.0, %v597
        %599 = vdwg.mxu0
        %600 = vrot.lane.b32.xlu0 %v422, 112
        %v601 = vpop.permute.xlu0 %600
        %602 = vrot.lane.b32.xlu0 %v423, 112
        %v603 = vpop.permute.xlu0 %602
        %604 = vrot.lane.b32.xlu0 %v420, 112
        %v605 = vpop.permute.xlu0 %604
        %v606 = vsel %vm424, %v601, 0
        %v608 = vsel %vm424, %v603, 0
        %v610 = vsel %vm424, %v605, 0
        %612 = vmatpush.xpose.msra.mxu0 0.0
        %613 = vmatpush.xpose.msra.mxu0 0.0
        %614 = vmatpush.xpose.msra.mxu0 0.0
        %615 = vmatpush.xpose.msra.mxu0 0.0
        %616 = vmatpush.xpose.msra.mxu0 0.0
        %617 = vmatpush.xpose.msra.mxu0 0.0
        %618 = vmatpush.xpose.msra.mxu0 0.0
        %619 = vmatpush.xpose.msra.mxu0 0.0
        %620 = vmatpush.xpose.msra.mxu0 0.0
        %621 = vmatpush.xpose.msra.mxu0 0.0
        %622 = vmatpush.xpose.msra.mxu0 0.0
        %623 = vmatpush.xpose.msra.mxu0 0.0
        %624 = vmatpush.xpose.msra.mxu0 0.0
        %625 = vmatpush.xpose.msra.mxu0 0.0
        %626 = vmatpush.xpose.msra.mxu0 0.0
        %627 = vmatpush.xpose.msra.mxu0 %v610
        %628 = vmatmul.f32.gmra.mxu0 %v606
        %v629 = vpop.f32.mrf.mxu0
        %v630 = vadd.f32 0.0, %v629
        %631 = vmatmul.f32.gmra.mxu0 %v608
        %v632 = vpop.f32.mrf.mxu0
        %v633 = vadd.f32 0.0, %v632
        %634 = vdwg.mxu0
        %v635 = vsel %vm424, %v630, -inf
        %636 = vmax.xlane.f32.xlu0 %v635
        %v637 = vpop.xlane.xlu0 %636
        %v638 = vsel %vm424, %v633, -inf
        %639 = vmax.xlane.f32.xlu0 %v638
        %v640 = vpop.xlane.xlu0 %639
        %v641 = vsub.f32 %v630, %v637
        %v642 = vsub.f32 %v633, %v640
        %v643 = vmul.f32 %v641, 1.442695
        %v644 = vpow.pop %v643
        %v645 = vmul.f32 %v642, 1.442695
        %v646 = vpow.pop %v645
        %v647 = vsel %vm424, %v644, 0.0
        %648 = vadd.xlane.f32.xlu0 %v647
        %v649 = vpop.xlane.xlu0 %648
        %v650 = vsel %vm424, %v646, 0.0
        %651 = vadd.xlane.f32.xlu0 %v650
        %v652 = vpop.xlane.xlu0 %651
        %v653 = vrcp.pop %v649
        %v654 = vrcp.pop %v652
        %v655 = vmul.f32 %v644, %v653
        %v656 = vmul.f32 %v646, %v654
        %657 = vrot.lane.b32.xlu0 %v420, 80
        %v658 = vpop.permute.xlu0 %657
        %v661 = vsel %vm424, %v655, 0
        %v664 = vsel %vm424, %v656, 0
        %666 = vmatpush.msra.mxu0 0.0
        %667 = vmatpush.msra.mxu0 0.0
        %668 = vmatpush.msra.mxu0 0.0
        %669 = vmatpush.msra.mxu0 0.0
        %670 = vmatpush.msra.mxu0 0.0
        %671 = vmatpush.msra.mxu0 0.0
        %672 = vmatpush.msra.mxu0 0.0
        %673 = vmatpush.msra.mxu0 0.0
        %674 = vmatpush.msra.mxu0 0.0
        %675 = vmatpush.msra.mxu0 0.0
        %676 = vmatpush.msra.mxu0 0.0
        %677 = vmatpush.msra.mxu0 0.0
        %678 = vmatpush.msra.mxu0 0.0
        %679 = vmatpush.msra.mxu0 0.0
        %680 = vmatpush.msra.mxu0 0.0
        %681 = vmatpush.msra.mxu0 %v658
        %682 = vmatmul.f32.gmra.mxu0 %v661
        %v683 = vpop.f32.mrf.mxu0
        %v684 = vadd.f32 0.0, %v683
        %685 = vmatmul.f32.gmra.mxu0 %v664
        %v686 = vpop.f32.mrf.mxu0
        %v687 = vadd.f32 0.0, %v686
        %688 = vdwg.mxu0
        %689 = vrot.lane.b32.xlu0 %v422, 104
        %v690 = vpop.permute.xlu0 %689
        %691 = vrot.lane.b32.xlu0 %v423, 104
        %v692 = vpop.permute.xlu0 %691
        %693 = vrot.lane.b32.xlu0 %v420, 104
        %v694 = vpop.permute.xlu0 %693
        %v695 = vsel %vm424, %v690, 0
        %v697 = vsel %vm424, %v692, 0
        %v699 = vsel %vm424, %v694, 0
        %701 = vmatpush.xpose.msra.mxu0 0.0
        %702 = vmatpush.xpose.msra.mxu0 0.0
        %703 = vmatpush.xpose.msra.mxu0 0.0
        %704 = vmatpush.xpose.msra.mxu0 0.0
        %705 = vmatpush.xpose.msra.mxu0 0.0
        %706 = vmatpush.xpose.msra.mxu0 0.0
        %707 = vmatpush.xpose.msra.mxu0 0.0
        %708 = vmatpush.xpose.msra.mxu0 0.0
        %709 = vmatpush.xpose.msra.mxu0 0.0
        %710 = vmatpush.xpose.msra.mxu0 0.0
        %711 = vmatpush.xpose.msra.mxu0 0.0
        %712 = vmatpush.xpose.msra.mxu0 0.0
        %713 = vmatpush.xpose.msra.mxu0 0.0
        %714 = vmatpush.xpose.msra.mxu0 0.0
        %715 = vmatpush.xpose.msra.mxu0 0.0
        %716 = vmatpush.xpose.msra.mxu0 %v699
        %717 = vmatmul.f32.gmra.mxu0 %v695
        %v718 = vpop.f32.mrf.mxu0
        %v719 = vadd.f32 0.0, %v718
        %720 = vmatmul.f32.gmra.mxu0 %v697
        %v721 = vpop.f32.mrf.mxu0
        %v722 = vadd.f32 0.0, %v721
        %723 = vdwg.mxu0
        %v724 = vsel %vm424, %v719, -inf
        %725 = vmax.xlane.f32.xlu0 %v724
        %v726 = vpop.xlane.xlu0 %725
        %v727 = vsel %vm424, %v722, -inf
        %728 = vmax.xlane.f32.xlu0 %v727
        %v729 = vpop.xlane.xlu0 %728
        %v730 = vsub.f32 %v719, %v726
        %v731 = vsub.f32 %v722, %v729
        %v732 = vmul.f32 %v730, 1.442695
        %v733 = vpow.pop %v732
        %v734 = vmul.f32 %v731, 1.442695
        %v735 = vpow.pop %v734
        %v736 = vsel %vm424, %v733, 0.0
        %737 = vadd.xlane.f32.xlu0 %v736
        %v738 = vpop.xlane.xlu0 %737
        %v739 = vsel %vm424, %v735, 0.0
        %740 = vadd.xlane.f32.xlu0 %v739
        %v741 = vpop.xlane.xlu0 %740
        %v742 = vrcp.pop %v738
        %v743 = vrcp.pop %v741
        %v744 = vmul.f32 %v733, %v742
        %v745 = vmul.f32 %v735, %v743
        %746 = vrot.lane.b32.xlu0 %v420, 72
        %v747 = vpop.permute.xlu0 %746
        %v750 = vsel %vm424, %v744, 0
        %v753 = vsel %vm424, %v745, 0
        %755 = vmatpush.msra.mxu0 0.0
        %756 = vmatpush.msra.mxu0 0.0
        %757 = vmatpush.msra.mxu0 0.0
        %758 = vmatpush.msra.mxu0 0.0
        %759 = vmatpush.msra.mxu0 0.0
        %760 = vmatpush.msra.mxu0 0.0
        %761 = vmatpush.msra.mxu0 0.0
        %762 = vmatpush.msra.mxu0 0.0
        %763 = vmatpush.msra.mxu0 0.0
        %764 = vmatpush.msra.mxu0 0.0
        %765 = vmatpush.msra.mxu0 0.0
        %766 = vmatpush.msra.mxu0 0.0
        %767 = vmatpush.msra.mxu0 0.0
        %768 = vmatpush.msra.mxu0 0.0
        %769 = vmatpush.msra.mxu0 0.0
        %770 = vmatpush.msra.mxu0 %v747
        %771 = vmatmul.f32.gmra.mxu0 %v750
        %v772 = vpop.f32.mrf.mxu0
        %v773 = vadd.f32 0.0, %v772
        %774 = vmatmul.f32.gmra.mxu0 %v753
        %v775 = vpop.f32.mrf.mxu0
        %v776 = vadd.f32 0.0, %v775
        %777 = vdwg.mxu0
        %780 = vrot.lane.b32.xlu0 %v595, 8
        %v781 = vpop.permute.xlu0 %780
        %782 = vrot.lane.b32.xlu0 %v598, 8
        %v783 = vpop.permute.xlu0 %782
        %788 = vrot.lane.b32.xlu0 %v684, 16
        %v789 = vpop.permute.xlu0 %788
        %790 = vrot.lane.b32.xlu0 %v687, 16
        %v791 = vpop.permute.xlu0 %790
        %796 = vrot.lane.b32.xlu0 %v773, 24
        %v797 = vpop.permute.xlu0 %796
        %798 = vrot.lane.b32.xlu0 %v776, 24
        %v799 = vpop.permute.xlu0 %798
        %v802 = vsel %vm424, %v506, %v781
        %v803 = vsel %vm424, %v509, %v783
        %vm804 = vcmask 130048
        %v805 = vsel %vm804, %v802, %v789
        %v806 = vsel %vm804, %v803, %v791
        %vm807 = vcmask 195584
        %v808 = vsel %vm807, %v805, %v797
        %v809 = vsel %vm807, %v806, %v799
        %v810 = vperm.slane %v249, 4
        %v812 = vsel %vm306, %v808, 0
        %v815 = vsel %vm306, %v809, 0
        %817 = vmatpush.msra.mxu0 0.0
        %818 = vmatpush.msra.mxu0 0.0
        %819 = vmatpush.msra.mxu0 0.0
        %820 = vmatpush.msra.mxu0 0.0
        %821 = vmatpush.msra.mxu0 0.0
        %822 = vmatpush.msra.mxu0 0.0
        %823 = vmatpush.msra.mxu0 0.0
        %824 = vmatpush.msra.mxu0 0.0
        %825 = vmatpush.msra.mxu0 0.0
        %826 = vmatpush.msra.mxu0 0.0
        %827 = vmatpush.msra.mxu0 0.0
        %828 = vmatpush.msra.mxu0 0.0
        %829 = vmatpush.msra.mxu0 %v268
        %830 = vmatpush.msra.mxu0 %v267
        %831 = vmatpush.msra.mxu0 %v266
        %832 = vmatpush.msra.mxu0 %v265
        %833 = vmatmul.f32.gmra.mxu0 %v812
        %v834 = vpop.f32.mrf.mxu0
        %v835 = vadd.f32 %v810, %v834
        %836 = vmatmul.f32.gmra.mxu0 %v815
        %v837 = vpop.f32.mrf.mxu0
        %v838 = vadd.f32 %v810, %v837
        %839 = vdwg.mxu0
        %v840 = vrot.slane %v835, 7
        %v841 = vrot.slane %v838, 7
        %v842 = vlaneseq
        %v843 = vshrl.u32 %v842, 7
        %vm844 = vcmp.lt.s32.totalorder %v843, 1
        %v845 = vsel %vm844, %v840, %v841
        %v846 = vsel %vm844, %v841, %v840
        %v847 = vmul.f32 %v846, %v253
        %v848 = vmul.f32 %v845, %v254
        %v849 = vrot.slane %v835, 1
        %v850 = vrot.slane %v838, 1
        %vm851 = vcmp.lt.s32.totalorder %v843, 7
        %v852 = vsel %vm851, %v849, %v850
        %v853 = vsel %vm851, %v850, %v849
        %v854 = vmul.f32 %v852, %v255
        %v855 = vmul.f32 %v853, %v256
        %v857 = vsel %vm306, %v835, 0
        %v860 = vsel %vm306, %v838, 0
        %862 = vmatpush.msra.mxu0 0.0
        %863 = vmatpush.msra.mxu0 0.0
        %864 = vmatpush.msra.mxu0 0.0
        %865 = vmatpush.msra.mxu0 0.0
        %866 = vmatpush.msra.mxu0 0.0
        %867 = vmatpush.msra.mxu0 0.0
        %868 = vmatpush.msra.mxu0 0.0
        %869 = vmatpush.msra.mxu0 0.0
        %870 = vmatpush.msra.mxu0 0.0
        %871 = vmatpush.msra.mxu0 0.0
        %872 = vmatpush.msra.mxu0 0.0
        %873 = vmatpush.msra.mxu0 0.0
        %874 = vmatpush.msra.mxu0 %v296
        %875 = vmatpush.msra.mxu0 %v295
        %876 = vmatpush.msra.mxu0 %v294
        %877 = vmatpush.msra.mxu0 %v293
        %878 = vmatmul.f32.gmra.mxu0 %v857
        %v879 = vpop.f32.mrf.mxu0
        %v880 = vadd.f32 0.0, %v879
        %881 = vmatmul.f32.gmra.mxu0 %v860
        %v882 = vpop.f32.mrf.mxu0
        %v883 = vadd.f32 0.0, %v882
        %884 = vdwg.mxu0
        %v886 = vsel %vm306, %v847, 0
        %v889 = vsel %vm306, %v848, 0
        %891 = vmatpush.msra.mxu0 0.0
        %892 = vmatpush.msra.mxu0 0.0
        %893 = vmatpush.msra.mxu0 0.0
        %894 = vmatpush.msra.mxu0 0.0
        %895 = vmatpush.msra.mxu0 0.0
        %896 = vmatpush.msra.mxu0 0.0
        %897 = vmatpush.msra.mxu0 0.0
        %898 = vmatpush.msra.mxu0 0.0
        %899 = vmatpush.msra.mxu0 0.0
        %900 = vmatpush.msra.mxu0 0.0
        %901 = vmatpush.msra.mxu0 0.0
        %902 = vmatpush.msra.mxu0 0.0
        %903 = vmatpush.msra.mxu0 %v292
        %904 = vmatpush.msra.mxu0 %v291
        %905 = vmatpush.msra.mxu0 %v290
        %906 = vmatpush.msra.mxu0 %v289
        %907 = vmatmul.f32.gmra.mxu0 %v886
        %v908 = vpop.f32.mrf.mxu0
        %v909 = vadd.f32 %v880, %v908
        %910 = vmatmul.f32.gmra.mxu0 %v889
        %v911 = vpop.f32.mrf.mxu0
        %v912 = vadd.f32 %v883, %v911
        %913 = vdwg.mxu0
        %v915 = vsel %vm306, %v854, 0
        %v918 = vsel %vm306, %v855, 0
        %920 = vmatpush.msra.mxu0 0.0
        %921 = vmatpush.msra.mxu0 0.0
        %922 = vmatpush.msra.mxu0 0.0
        %923 = vmatpush.msra.mxu0 0.0
        %924 = vmatpush.msra.mxu0 0.0
        %925 = vmatpush.msra.mxu0 0.0
        %926 = vmatpush.msra.mxu0 0.0
        %927 = vmatpush.msra.mxu0 0.0
        %928 = vmatpush.msra.mxu0 0.0
        %929 = vmatpush.msra.mxu0 0.0
        %930 = vmatpush.msra.mxu0 0.0
        %931 = vmatpush.msra.mxu0 0.0
        %932 = vmatpush.msra.mxu0 %v300
        %933 = vmatpush.msra.mxu0 %v299
        %934 = vmatpush.msra.mxu0 %v298
        %935 = vmatpush.msra.mxu0 %v297
        %936 = vmatmul.f32.gmra.mxu0 %v915
        %v937 = vpop.f32.mrf.mxu0
        %v938 = vadd.f32 0.0, %v937
        %939 = vmatmul.f32.gmra.mxu0 %v918
        %v940 = vpop.f32.mrf.mxu0
        %v941 = vadd.f32 0.0, %v940
        %942 = vdwg.mxu0
        %v943 = vadd.f32 %v909, %v938
        %v944 = vadd.f32 %v912, %v941
        %v945 = vperm.slane %v249, 5
        %v946 = vadd.f32 %v943, %v945
        %v947 = vadd.f32 %v944, %v945
        %v948 = vmax.f32 %v946, 0.0
        %v949 = vmax.f32 %v947, 0.0
        %v950 = vadd.f32 %v246, %v948
        %v951 = vadd.f32 %v247, %v949
        %v952 = vsel %vm306, %v948, 0.0
        %953 = vadd.xlane.f32.xlu0 %v952
        %v954 = vpop.xlane.xlu0 %953
        %v955 = vsel %vm306, %v949, 0.0
        %956 = vadd.xlane.f32.xlu0 %v955
        %v957 = vpop.xlane.xlu0 %956
        %v958 = vmul.f32 %v954, %v319
        %v959 = vmul.f32 %v957, %v319
        %v960 = vmul.f32 %v948, %v948
        %v961 = vmul.f32 %v949, %v949
        %v962 = vsel %vm306, %v960, 0.0
        %963 = vadd.xlane.f32.xlu0 %v962
        %v964 = vpop.xlane.xlu0 %963
        %v965 = vsel %vm306, %v961, 0.0
        %966 = vadd.xlane.f32.xlu0 %v965
        %v967 = vpop.xlane.xlu0 %966
        %v968 = vmul.f32 %v964, %v319
        %v969 = vmul.f32 %v967, %v319
        %v970 = vmul.f32 %v958, %v958
        %v971 = vmul.f32 %v959, %v959
        %v972 = vsub.f32 %v968, %v970
        %v973 = vsub.f32 %v969, %v971
        %v974 = vsub.f32 %v948, %v958
        %v975 = vsub.f32 %v949, %v959
        %v976 = vadd.f32 %v972, 1e-05
        %v977 = vadd.f32 %v973, 1e-05
        %v978 = vrsqrt.pop %v976
        %v979 = vmul.f32 %v978, %v976
        %v980 = vmul.f32 %v979, %v978
        %v981 = vmul.f32 0.5, %v980
        %v982 = vsub.f32 1.5, %v981
        %v983 = vmul.f32 %v978, %v982
        %vm984 = vweird.f32 %v976
        %vm985 = vweird.f32 %v978
        %vm986 = vmor %vm984, %vm985
        %v987 = vsel %vm986, %v978, %v983
        %v988 = vrsqrt.pop %v977
        %v989 = vmul.f32 %v988, %v977
        %v990 = vmul.f32 %v989, %v988
        %v991 = vmul.f32 0.5, %v990
        %v992 = vsub.f32 1.5, %v991
        %v993 = vmul.f32 %v988, %v992
        %vm994 = vweird.f32 %v977
        %vm995 = vweird.f32 %v988
        %vm996 = vmor %vm994, %vm995
        %v997 = vsel %vm996, %v988, %v993
        %v998 = vmul.f32 %v974, %v987
        %v999 = vmul.f32 %v975, %v997
        %v1000 = vperm.slane %v249, 6
        %v1001 = vmul.f32 %v998, %v1000
        %v1002 = vmul.f32 %v999, %v1000
        %v1003 = vperm.slane %v249, 7
        %v1004 = vadd.f32 %v1001, %v1003
        %v1005 = vadd.f32 %v1002, %v1003
        %v1006 = vperm.slane %v250, 0
        %v1008 = vsel %vm306, %v1004, 0
        %v1011 = vsel %vm306, %v1005, 0
        %1013 = vmatpush.msra.mxu0 0.0
        %1014 = vmatpush.msra.mxu0 0.0
        %1015 = vmatpush.msra.mxu0 0.0
        %1016 = vmatpush.msra.mxu0 0.0
        %1017 = vmatpush.msra.mxu0 0.0
        %1018 = vmatpush.msra.mxu0 0.0
        %1019 = vmatpush.msra.mxu0 0.0
        %1020 = vmatpush.msra.mxu0 0.0
        %1021 = vmatpush.msra.mxu0 0.0
        %1022 = vmatpush.msra.mxu0 0.0
        %1023 = vmatpush.msra.mxu0 0.0
        %1024 = vmatpush.msra.mxu0 0.0
        %1025 = vmatpush.msra.mxu0 %v272
        %1026 = vmatpush.msra.mxu0 %v271
        %1027 = vmatpush.msra.mxu0 %v270
        %1028 = vmatpush.msra.mxu0 %v269
        %1029 = vmatmul.f32.gmra.mxu0 %v1008
        %v1030 = vpop.f32.mrf.mxu0
        %v1031 = vadd.f32 %v1006, %v1030
        %1032 = vmatmul.f32.gmra.mxu0 %v1011
        %v1033 = vpop.f32.mrf.mxu0
        %v1034 = vadd.f32 %v1006, %v1033
        %1035 = vdwg.mxu0
        %v1036 = vmax.f32 %v1031, 0.0
        %v1037 = vmax.f32 %v1034, 0.0
        %v1038 = vperm.slane %v250, 1
        %1039 = vmatpush.msra.mxu0 %v288
        %1040 = vmatpush.msra.mxu0 %v287
        %1041 = vmatpush.msra.mxu0 %v286
        %1042 = vmatpush.msra.mxu0 %v285
        %1043 = vmatpush.msra.mxu0 %v284
        %1044 = vmatpush.msra.mxu0 %v283
        %1045 = vmatpush.msra.mxu0 %v282
        %1046 = vmatpush.msra.mxu0 %v281
        %1047 = vmatpush.msra.mxu0 %v280
        %1048 = vmatpush.msra.mxu0 %v279
        %1049 = vmatpush.msra.mxu0 %v278
        %1050 = vmatpush.msra.mxu0 %v277
        %1051 = vmatpush.msra.mxu0 %v276
        %1052 = vmatpush.msra.mxu0 %v275
        %1053 = vmatpush.msra.mxu0 %v274
        %1054 = vmatpush.msra.mxu0 %v273
        %1055 = vmatmul.f32.gmra.mxu0 %v1036
        %v1056 = vpop.f32.mrf.mxu0
        %v1057 = vadd.f32 %v1038, %v1056
        %1058 = vmatmul.f32.gmra.mxu0 %v1037
        %v1059 = vpop.f32.mrf.mxu0
        %v1060 = vadd.f32 %v1038, %v1059
        %1061 = vdwg.mxu0
        %v1062 = vadd.f32 %v950, %v1057
        %v1063 = vadd.f32 %v951, %v1060
        %v1064 = vsel %vm306, %v1062, 0.0
        %1065 = vadd.xlane.f32.xlu0 %v1064
        %v1066 = vpop.xlane.xlu0 %1065
        %v1067 = vsel %vm306, %v1063, 0.0
        %1068 = vadd.xlane.f32.xlu0 %v1067
        %v1069 = vpop.xlane.xlu0 %1068
        %v1070 = vmul.f32 %v1066, %v319
        %v1071 = vmul.f32 %v1069, %v319
        %v1072 = vmul.f32 %v1062, %v1062
        %v1073 = vmul.f32 %v1063, %v1063
        %v1074 = vsel %vm306, %v1072, 0.0
        %1075 = vadd.xlane.f32.xlu0 %v1074
        %v1076 = vpop.xlane.xlu0 %1075
        %v1077 = vsel %vm306, %v1073, 0.0
        %1078 = vadd.xlane.f32.xlu0 %v1077
        %v1079 = vpop.xlane.xlu0 %1078
        %v1080 = vmul.f32 %v1076, %v319
        %v1081 = vmul.f32 %v1079, %v319
        %v1082 = vmul.f32 %v1070, %v1070
        %v1083 = vmul.f32 %v1071, %v1071
        %v1084 = vsub.f32 %v1080, %v1082
        %v1085 = vsub.f32 %v1081, %v1083
        %v1086 = vsub.f32 %v1062, %v1070
        %v1087 = vsub.f32 %v1063, %v1071
        %v1088 = vadd.f32 %v1084, 1e-05
        %v1089 = vadd.f32 %v1085, 1e-05
        %v1090 = vrsqrt.pop %v1088
        %v1091 = vmul.f32 %v1090, %v1088
        %v1092 = vmul.f32 %v1091, %v1090
        %v1093 = vmul.f32 0.5, %v1092
        %v1094 = vsub.f32 1.5, %v1093
        %v1095 = vmul.f32 %v1090, %v1094
        %vm1096 = vweird.f32 %v1088
        %vm1097 = vweird.f32 %v1090
        %vm1098 = vmor %vm1096, %vm1097
        %v1099 = vsel %vm1098, %v1090, %v1095
        %v1100 = vrsqrt.pop %v1089
        %v1101 = vmul.f32 %v1100, %v1089
        %v1102 = vmul.f32 %v1101, %v1100
        %v1103 = vmul.f32 0.5, %v1102
        %v1104 = vsub.f32 1.5, %v1103
        %v1105 = vmul.f32 %v1100, %v1104
        %vm1106 = vweird.f32 %v1089
        %vm1107 = vweird.f32 %v1100
        %vm1108 = vmor %vm1106, %vm1107
        %v1109 = vsel %vm1108, %v1100, %v1105
        %v1110 = vmul.f32 %v1086, %v1099
        %v1111 = vmul.f32 %v1087, %v1109
        %v1112 = vperm.slane %v250, 2
        %v1113 = vmul.f32 %v1110, %v1112
        %v1114 = vmul.f32 %v1111, %v1112
        %v1115 = vperm.slane %v250, 3
        %v1116 = vadd.f32 %v1113, %v1115
        %v1117 = vadd.f32 %v1114, %v1115
        %v1118 = vperm.slane %v250, 4
        %v1120 = vsel %vm306, %v1116, 0
        %v1123 = vsel %vm306, %v1117, 0
        %1125 = vmatpush.msra.mxu0 0.0
        %1126 = vmatpush.msra.mxu0 0.0
        %1127 = vmatpush.msra.mxu0 0.0
        %1128 = vmatpush.msra.mxu0 0.0
        %1129 = vmatpush.msra.mxu0 0.0
        %1130 = vmatpush.msra.mxu0 0.0
        %1131 = vmatpush.msra.mxu0 0.0
        %1132 = vmatpush.msra.mxu0 0.0
        %1133 = vmatpush.msra.mxu0 0.0
        %1134 = vmatpush.msra.mxu0 0.0
        %1135 = vmatpush.msra.mxu0 0.0
        %1136 = vmatpush.msra.mxu0 0.0
        %1137 = vmatpush.msra.mxu0 %v304
        %1138 = vmatpush.msra.mxu0 %v303
        %1139 = vmatpush.msra.mxu0 %v302
        %1140 = vmatpush.msra.mxu0 %v301
        %1141 = vmatmul.f32.gmra.mxu0 %v1120
        %v1142 = vpop.f32.mrf.mxu0
        %v1143 = vadd.f32 %v1118, %v1142
        %1144 = vmatmul.f32.gmra.mxu0 %v1123
        %v1145 = vpop.f32.mrf.mxu0
        %v1146 = vadd.f32 %v1118, %v1145
        %1147 = vdwg.mxu0
        %v1148 = vmul.f32 %v1143, 0.70710677
        %v1149 = vmul.f32 %v1146, 0.70710677
        %1152 = vrot.lane.b32.xlu0 %v1143, 120
        %v1153 = vpop.permute.xlu0 %1152
        %1154 = vrot.lane.b32.xlu0 %v1146, 120
        %v1155 = vpop.permute.xlu0 %1154
        %vm1156 = vcmask 15360
        %v1158 = vsel %vm1156, %v1148, 0
        %v1161 = vsel %vm1156, %v1149, 0
        %v1163 = vsel %vm1156, %v1153, 0
        %v1165 = vsel %vm1156, %v1155, 0
        %1167 = vmatpush.xpose.msra.mxu0 0.0
        %1168 = vmatpush.xpose.msra.mxu0 0.0
        %1169 = vmatpush.xpose.msra.mxu0 0.0
        %1170 = vmatpush.xpose.msra.mxu0 0.0
        %1171 = vmatpush.xpose.msra.mxu0 0.0
        %1172 = vmatpush.xpose.msra.mxu0 0.0
        %1173 = vmatpush.xpose.msra.mxu0 0.0
        %1174 = vmatpush.xpose.msra.mxu0 0.0
        %1175 = vmatpush.xpose.msra.mxu0 0.0
        %1176 = vmatpush.xpose.msra.mxu0 0.0
        %1177 = vmatpush.xpose.msra.mxu0 0.0
        %1178 = vmatpush.xpose.msra.mxu0 0.0
        %1179 = vmatpush.xpose.msra.mxu0 0.0
        %1180 = vmatpush.xpose.msra.mxu0 0.0
        %1181 = vmatpush.xpose.msra.mxu0 %v1165
        %1182 = vmatpush.xpose.msra.mxu0 %v1163
        %1183 = vmatmul.f32.gmra.mxu0 %v1158
        %v1184 = vpop.f32.mrf.mxu0
        %v1185 = vadd.f32 %v251, %v1184
        %1186 = vmatmul.f32.gmra.mxu0 %v1161
        %v1187 = vpop.f32.mrf.mxu0
        %v1188 = vadd.f32 %v252, %v1187
        %1189 = vdwg.mxu0
        %v1190 = vsel %vm804, %v1185, -inf
        %1191 = vmax.xlane.f32.xlu0 %v1190
        %v1192 = vpop.xlane.xlu0 %1191
        %v1193 = vsel %vm804, %v1188, -inf
        %1194 = vmax.xlane.f32.xlu0 %v1193
        %v1195 = vpop.xlane.xlu0 %1194
        %v1196 = vsub.f32 %v1185, %v1192
        %v1197 = vsub.f32 %v1188, %v1195
        %v1198 = vmul.f32 %v1196, 1.442695
        %v1199 = vpow.pop %v1198
        %v1200 = vmul.f32 %v1197, 1.442695
        %v1201 = vpow.pop %v1200
        %v1202 = vsel %vm804, %v1199, 0.0
        %1203 = vadd.xlane.f32.xlu0 %v1202
        %v1204 = vpop.xlane.xlu0 %1203
        %v1205 = vsel %vm804, %v1201, 0.0
        %1206 = vadd.xlane.f32.xlu0 %v1205
        %v1207 = vpop.xlane.xlu0 %1206
        %v1208 = vrcp.pop %v1204
        %v1209 = vrcp.pop %v1207
        %v1210 = vmul.f32 %v1199, %v1208
        %v1211 = vmul.f32 %v1201, %v1209
        %1212 = vrot.lane.b32.xlu0 %v1143, 112
        %v1213 = vpop.permute.xlu0 %1212
        %1214 = vrot.lane.b32.xlu0 %v1146, 112
        %v1215 = vpop.permute.xlu0 %1214
        %v1219 = vsel %vm804, %v1210, 0
        %v1222 = vsel %vm804, %v1211, 0
        %1224 = vmatpush.msra.mxu0 0.0
        %1225 = vmatpush.msra.mxu0 0.0
        %1226 = vmatpush.msra.mxu0 0.0
        %1227 = vmatpush.msra.mxu0 0.0
        %1228 = vmatpush.msra.mxu0 0.0
        %1229 = vmatpush.msra.mxu0 0.0
        %1230 = vmatpush.msra.mxu0 0.0
        %1231 = vmatpush.msra.mxu0 0.0
        %1232 = vmatpush.msra.mxu0 0.0
        %1233 = vmatpush.msra.mxu0 0.0
        %1234 = vmatpush.msra.mxu0 0.0
        %1235 = vmatpush.msra.mxu0 0.0
        %1236 = vmatpush.msra.mxu0 0.0
        %1237 = vmatpush.msra.mxu0 0.0
        %1238 = vmatpush.msra.mxu0 %v1215
        %1239 = vmatpush.msra.mxu0 %v1213
        %1240 = vmatmul.f32.gmra.mxu0 %v1219
        %v1241 = vpop.f32.mrf.mxu0
        %v1242 = vadd.f32 0.0, %v1241
        %1243 = vmatmul.f32.gmra.mxu0 %v1222
        %v1244 = vpop.f32.mrf.mxu0
        %v1245 = vadd.f32 0.0, %v1244
        %1246 = vdwg.mxu0
        %1247 = vrot.lane.b32.xlu0 %v1148, 126
        %v1248 = vpop.permute.xlu0 %1247
        %1249 = vrot.lane.b32.xlu0 %v1149, 126
        %v1250 = vpop.permute.xlu0 %1249
        %1251 = vrot.lane.b32.xlu0 %v1143, 118
        %v1252 = vpop.permute.xlu0 %1251
        %1253 = vrot.lane.b32.xlu0 %v1146, 118
        %v1254 = vpop.permute.xlu0 %1253
        %v1255 = vsel %vm1156, %v1248, 0
        %v1257 = vsel %vm1156, %v1250, 0
        %v1259 = vsel %vm1156, %v1252, 0
        %v1261 = vsel %vm1156, %v1254, 0
        %1263 = vmatpush.xpose.msra.mxu0 0.0
        %1264 = vmatpush.xpose.msra.mxu0 0.0
        %1265 = vmatpush.xpose.msra.mxu0 0.0
        %1266 = vmatpush.xpose.msra.mxu0 0.0
        %1267 = vmatpush.xpose.msra.mxu0 0.0
        %1268 = vmatpush.xpose.msra.mxu0 0.0
        %1269 = vmatpush.xpose.msra.mxu0 0.0
        %1270 = vmatpush.xpose.msra.mxu0 0.0
        %1271 = vmatpush.xpose.msra.mxu0 0.0
        %1272 = vmatpush.xpose.msra.mxu0 0.0
        %1273 = vmatpush.xpose.msra.mxu0 0.0
        %1274 = vmatpush.xpose.msra.mxu0 0.0
        %1275 = vmatpush.xpose.msra.mxu0 0.0
        %1276 = vmatpush.xpose.msra.mxu0 0.0
        %1277 = vmatpush.xpose.msra.mxu0 %v1261
        %1278 = vmatpush.xpose.msra.mxu0 %v1259
        %1279 = vmatmul.f32.gmra.mxu0 %v1255
        %v1280 = vpop.f32.mrf.mxu0
        %v1281 = vadd.f32 %v251, %v1280
        %1282 = vmatmul.f32.gmra.mxu0 %v1257
        %v1283 = vpop.f32.mrf.mxu0
        %v1284 = vadd.f32 %v252, %v1283
        %1285 = vdwg.mxu0
        %v1286 = vsel %vm804, %v1281, -inf
        %1287 = vmax.xlane.f32.xlu0 %v1286
        %v1288 = vpop.xlane.xlu0 %1287
        %v1289 = vsel %vm804, %v1284, -inf
        %1290 = vmax.xlane.f32.xlu0 %v1289
        %v1291 = vpop.xlane.xlu0 %1290
        %v1292 = vsub.f32 %v1281, %v1288
        %v1293 = vsub.f32 %v1284, %v1291
        %v1294 = vmul.f32 %v1292, 1.442695
        %v1295 = vpow.pop %v1294
        %v1296 = vmul.f32 %v1293, 1.442695
        %v1297 = vpow.pop %v1296
        %v1298 = vsel %vm804, %v1295, 0.0
        %1299 = vadd.xlane.f32.xlu0 %v1298
        %v1300 = vpop.xlane.xlu0 %1299
        %v1301 = vsel %vm804, %v1297, 0.0
        %1302 = vadd.xlane.f32.xlu0 %v1301
        %v1303 = vpop.xlane.xlu0 %1302
        %v1304 = vrcp.pop %v1300
        %v1305 = vrcp.pop %v1303
        %v1306 = vmul.f32 %v1295, %v1304
        %v1307 = vmul.f32 %v1297, %v1305
        %1308 = vrot.lane.b32.xlu0 %v1143, 110
        %v1309 = vpop.permute.xlu0 %1308
        %1310 = vrot.lane.b32.xlu0 %v1146, 110
        %v1311 = vpop.permute.xlu0 %1310
        %v1315 = vsel %vm804, %v1306, 0
        %v1318 = vsel %vm804, %v1307, 0
        %1320 = vmatpush.msra.mxu0 0.0
        %1321 = vmatpush.msra.mxu0 0.0
        %1322 = vmatpush.msra.mxu0 0.0
        %1323 = vmatpush.msra.mxu0 0.0
        %1324 = vmatpush.msra.mxu0 0.0
        %1325 = vmatpush.msra.mxu0 0.0
        %1326 = vmatpush.msra.mxu0 0.0
        %1327 = vmatpush.msra.mxu0 0.0
        %1328 = vmatpush.msra.mxu0 0.0
        %1329 = vmatpush.msra.mxu0 0.0
        %1330 = vmatpush.msra.mxu0 0.0
        %1331 = vmatpush.msra.mxu0 0.0
        %1332 = vmatpush.msra.mxu0 0.0
        %1333 = vmatpush.msra.mxu0 0.0
        %1334 = vmatpush.msra.mxu0 %v1311
        %1335 = vmatpush.msra.mxu0 %v1309
        %1336 = vmatmul.f32.gmra.mxu0 %v1315
        %v1337 = vpop.f32.mrf.mxu0
        %v1338 = vadd.f32 0.0, %v1337
        %1339 = vmatmul.f32.gmra.mxu0 %v1318
        %v1340 = vpop.f32.mrf.mxu0
        %v1341 = vadd.f32 0.0, %v1340
        %1342 = vdwg.mxu0
        %1343 = vrot.lane.b32.xlu0 %v1148, 124
        %v1344 = vpop.permute.xlu0 %1343
        %1345 = vrot.lane.b32.xlu0 %v1149, 124
        %v1346 = vpop.permute.xlu0 %1345
        %1347 = vrot.lane.b32.xlu0 %v1143, 116
        %v1348 = vpop.permute.xlu0 %1347
        %1349 = vrot.lane.b32.xlu0 %v1146, 116
        %v1350 = vpop.permute.xlu0 %1349
        %v1351 = vsel %vm1156, %v1344, 0
        %v1353 = vsel %vm1156, %v1346, 0
        %v1355 = vsel %vm1156, %v1348, 0
        %v1357 = vsel %vm1156, %v1350, 0
        %1359 = vmatpush.xpose.msra.mxu0 0.0
        %1360 = vmatpush.xpose.msra.mxu0 0.0
        %1361 = vmatpush.xpose.msra.mxu0 0.0
        %1362 = vmatpush.xpose.msra.mxu0 0.0
        %1363 = vmatpush.xpose.msra.mxu0 0.0
        %1364 = vmatpush.xpose.msra.mxu0 0.0
        %1365 = vmatpush.xpose.msra.mxu0 0.0
        %1366 = vmatpush.xpose.msra.mxu0 0.0
        %1367 = vmatpush.xpose.msra.mxu0 0.0
        %1368 = vmatpush.xpose.msra.mxu0 0.0
        %1369 = vmatpush.xpose.msra.mxu0 0.0
        %1370 = vmatpush.xpose.msra.mxu0 0.0
        %1371 = vmatpush.xpose.msra.mxu0 0.0
        %1372 = vmatpush.xpose.msra.mxu0 0.0
        %1373 = vmatpush.xpose.msra.mxu0 %v1357
        %1374 = vmatpush.xpose.msra.mxu0 %v1355
        %1375 = vmatmul.f32.gmra.mxu0 %v1351
        %v1376 = vpop.f32.mrf.mxu0
        %v1377 = vadd.f32 %v251, %v1376
        %1378 = vmatmul.f32.gmra.mxu0 %v1353
        %v1379 = vpop.f32.mrf.mxu0
        %v1380 = vadd.f32 %v252, %v1379
        %1381 = vdwg.mxu0
        %v1382 = vsel %vm804, %v1377, -inf
        %1383 = vmax.xlane.f32.xlu0 %v1382
        %v1384 = vpop.xlane.xlu0 %1383
        %v1385 = vsel %vm804, %v1380, -inf
        %1386 = vmax.xlane.f32.xlu0 %v1385
        %v1387 = vpop.xlane.xlu0 %1386
        %v1388 = vsub.f32 %v1377, %v1384
        %v1389 = vsub.f32 %v1380, %v1387
        %v1390 = vmul.f32 %v1388, 1.442695
        %v1391 = vpow.pop %v1390
        %v1392 = vmul.f32 %v1389, 1.442695
        %v1393 = vpow.pop %v1392
        %v1394 = vsel %vm804, %v1391, 0.0
        %1395 = vadd.xlane.f32.xlu0 %v1394
        %v1396 = vpop.xlane.xlu0 %1395
        %v1397 = vsel %vm804, %v1393, 0.0
        %1398 = vadd.xlane.f32.xlu0 %v1397
        %v1399 = vpop.xlane.xlu0 %1398
        %v1400 = vrcp.pop %v1396
        %v1401 = vrcp.pop %v1399
        %v1402 = vmul.f32 %v1391, %v1400
        %v1403 = vmul.f32 %v1393, %v1401
        %1404 = vrot.lane.b32.xlu0 %v1143, 108
        %v1405 = vpop.permute.xlu0 %1404
        %1406 = vrot.lane.b32.xlu0 %v1146, 108
        %v1407 = vpop.permute.xlu0 %1406
        %v1411 = vsel %vm804, %v1402, 0
        %v1414 = vsel %vm804, %v1403, 0
        %1416 = vmatpush.msra.mxu0 0.0
        %1417 = vmatpush.msra.mxu0 0.0
        %1418 = vmatpush.msra.mxu0 0.0
        %1419 = vmatpush.msra.mxu0 0.0
        %1420 = vmatpush.msra.mxu0 0.0
        %1421 = vmatpush.msra.mxu0 0.0
        %1422 = vmatpush.msra.mxu0 0.0
        %1423 = vmatpush.msra.mxu0 0.0
        %1424 = vmatpush.msra.mxu0 0.0
        %1425 = vmatpush.msra.mxu0 0.0
        %1426 = vmatpush.msra.mxu0 0.0
        %1427 = vmatpush.msra.mxu0 0.0
        %1428 = vmatpush.msra.mxu0 0.0
        %1429 = vmatpush.msra.mxu0 0.0
        %1430 = vmatpush.msra.mxu0 %v1407
        %1431 = vmatpush.msra.mxu0 %v1405
        %1432 = vmatmul.f32.gmra.mxu0 %v1411
        %v1433 = vpop.f32.mrf.mxu0
        %v1434 = vadd.f32 0.0, %v1433
        %1435 = vmatmul.f32.gmra.mxu0 %v1414
        %v1436 = vpop.f32.mrf.mxu0
        %v1437 = vadd.f32 0.0, %v1436
        %1438 = vdwg.mxu0
        %1439 = vrot.lane.b32.xlu0 %v1148, 122
        %v1440 = vpop.permute.xlu0 %1439
        %1441 = vrot.lane.b32.xlu0 %v1149, 122
        %v1442 = vpop.permute.xlu0 %1441
        %1443 = vrot.lane.b32.xlu0 %v1143, 114
        %v1444 = vpop.permute.xlu0 %1443
        %1445 = vrot.lane.b32.xlu0 %v1146, 114
        %v1446 = vpop.permute.xlu0 %1445
        %v1447 = vsel %vm1156, %v1440, 0
        %v1449 = vsel %vm1156, %v1442, 0
        %v1451 = vsel %vm1156, %v1444, 0
        %v1453 = vsel %vm1156, %v1446, 0
        %1455 = vmatpush.xpose.msra.mxu0 0.0
        %1456 = vmatpush.xpose.msra.mxu0 0.0
        %1457 = vmatpush.xpose.msra.mxu0 0.0
        %1458 = vmatpush.xpose.msra.mxu0 0.0
        %1459 = vmatpush.xpose.msra.mxu0 0.0
        %1460 = vmatpush.xpose.msra.mxu0 0.0
        %1461 = vmatpush.xpose.msra.mxu0 0.0
        %1462 = vmatpush.xpose.msra.mxu0 0.0
        %1463 = vmatpush.xpose.msra.mxu0 0.0
        %1464 = vmatpush.xpose.msra.mxu0 0.0
        %1465 = vmatpush.xpose.msra.mxu0 0.0
        %1466 = vmatpush.xpose.msra.mxu0 0.0
        %1467 = vmatpush.xpose.msra.mxu0 0.0
        %1468 = vmatpush.xpose.msra.mxu0 0.0
        %1469 = vmatpush.xpose.msra.mxu0 %v1453
        %1470 = vmatpush.xpose.msra.mxu0 %v1451
        %1471 = vmatmul.f32.gmra.mxu0 %v1447
        %v1472 = vpop.f32.mrf.mxu0
        %v1473 = vadd.f32 %v251, %v1472
        %1474 = vmatmul.f32.gmra.mxu0 %v1449
        %v1475 = vpop.f32.mrf.mxu0
        %v1476 = vadd.f32 %v252, %v1475
        %1477 = vdwg.mxu0
        %v1478 = vsel %vm804, %v1473, -inf
        %1479 = vmax.xlane.f32.xlu0 %v1478
        %v1480 = vpop.xlane.xlu0 %1479
        %v1481 = vsel %vm804, %v1476, -inf
        %1482 = vmax.xlane.f32.xlu0 %v1481
        %v1483 = vpop.xlane.xlu0 %1482
        %v1484 = vsub.f32 %v1473, %v1480
        %v1485 = vsub.f32 %v1476, %v1483
        %v1486 = vmul.f32 %v1484, 1.442695
        %v1487 = vpow.pop %v1486
        %v1488 = vmul.f32 %v1485, 1.442695
        %v1489 = vpow.pop %v1488
        %v1490 = vsel %vm804, %v1487, 0.0
        %1491 = vadd.xlane.f32.xlu0 %v1490
        %v1492 = vpop.xlane.xlu0 %1491
        %v1493 = vsel %vm804, %v1489, 0.0
        %1494 = vadd.xlane.f32.xlu0 %v1493
        %v1495 = vpop.xlane.xlu0 %1494
        %v1496 = vrcp.pop %v1492
        %v1497 = vrcp.pop %v1495
        %v1498 = vmul.f32 %v1487, %v1496
        %v1499 = vmul.f32 %v1489, %v1497
        %1500 = vrot.lane.b32.xlu0 %v1143, 106
        %v1501 = vpop.permute.xlu0 %1500
        %1502 = vrot.lane.b32.xlu0 %v1146, 106
        %v1503 = vpop.permute.xlu0 %1502
        %v1507 = vsel %vm804, %v1498, 0
        %v1510 = vsel %vm804, %v1499, 0
        %1512 = vmatpush.msra.mxu0 0.0
        %1513 = vmatpush.msra.mxu0 0.0
        %1514 = vmatpush.msra.mxu0 0.0
        %1515 = vmatpush.msra.mxu0 0.0
        %1516 = vmatpush.msra.mxu0 0.0
        %1517 = vmatpush.msra.mxu0 0.0
        %1518 = vmatpush.msra.mxu0 0.0
        %1519 = vmatpush.msra.mxu0 0.0
        %1520 = vmatpush.msra.mxu0 0.0
        %1521 = vmatpush.msra.mxu0 0.0
        %1522 = vmatpush.msra.mxu0 0.0
        %1523 = vmatpush.msra.mxu0 0.0
        %1524 = vmatpush.msra.mxu0 0.0
        %1525 = vmatpush.msra.mxu0 0.0
        %1526 = vmatpush.msra.mxu0 %v1503
        %1527 = vmatpush.msra.mxu0 %v1501
        %1528 = vmatmul.f32.gmra.mxu0 %v1507
        %v1529 = vpop.f32.mrf.mxu0
        %v1530 = vadd.f32 0.0, %v1529
        %1531 = vmatmul.f32.gmra.mxu0 %v1510
        %v1532 = vpop.f32.mrf.mxu0
        %v1533 = vadd.f32 0.0, %v1532
        %1534 = vdwg.mxu0
        %1537 = vrot.lane.b32.xlu0 %v1338, 2
        %v1538 = vpop.permute.xlu0 %1537
        %1539 = vrot.lane.b32.xlu0 %v1341, 2
        %v1540 = vpop.permute.xlu0 %1539
        %1545 = vrot.lane.b32.xlu0 %v1434, 4
        %v1546 = vpop.permute.xlu0 %1545
        %1547 = vrot.lane.b32.xlu0 %v1437, 4
        %v1548 = vpop.permute.xlu0 %1547
        %1553 = vrot.lane.b32.xlu0 %v1530, 6
        %v1554 = vpop.permute.xlu0 %1553
        %1555 = vrot.lane.b32.xlu0 %v1533, 6
        %v1556 = vpop.permute.xlu0 %1555
        %v1559 = vsel %vm1156, %v1242, %v1538
        %v1560 = vsel %vm1156, %v1245, %v1540
        %vm1561 = vcmask 31744
        %v1562 = vsel %vm1561, %v1559, %v1546
        %v1563 = vsel %vm1561, %v1560, %v1548
        %vm1564 = vcmask 48128
        %v1565 = vsel %vm1564, %v1562, %v1554
        %v1566 = vsel %vm1564, %v1563, %v1556
        %v1567 = vperm.slane %v250, 5
        %v1569 = vsel %vm424, %v1565, 0
        %v1572 = vsel %vm424, %v1566, 0
        %1574 = vmatpush.msra.mxu0 0.0
        %1575 = vmatpush.msra.mxu0 0.0
        %1576 = vmatpush.msra.mxu0 0.0
        %1577 = vmatpush.msra.mxu0 0.0
        %1578 = vmatpush.msra.mxu0 0.0
        %1579 = vmatpush.msra.mxu0 0.0
        %1580 = vmatpush.msra.mxu0 0.0
        %1581 = vmatpush.msra.mxu0 0.0
        %1582 = vmatpush.msra.mxu0 0.0
        %1583 = vmatpush.msra.mxu0 0.0
        %1584 = vmatpush.msra.mxu0 0.0
        %1585 = vmatpush.msra.mxu0 0.0
        %1586 = vmatpush.msra.mxu0 0.0
        %1587 = vmatpush.msra.mxu0 0.0
        %1588 = vmatpush.msra.mxu0 0.0
        %1589 = vmatpush.msra.mxu0 %v305
        %1590 = vmatmul.f32.gmra.mxu0 %v1569
        %v1591 = vpop.f32.mrf.mxu0
        %v1592 = vadd.f32 %v1567, %v1591
        %1593 = vmatmul.f32.gmra.mxu0 %v1572
        %v1594 = vpop.f32.mrf.mxu0
        %v1595 = vadd.f32 %v1567, %v1594
        %1596 = vdwg.mxu0
        %v1597 = vadd.f32 %v1062, %v1592
        %v1598 = vadd.f32 %v1063, %v1595
        %1599 = vst.msk [vmem:[%s245] sm:$0xff] %vm306, %v1597
        %1600 = vst.msk [vmem:[%s245 + $0x8] sm:$0xff] %vm306, %v1598
        %s1601 = sand.u32 %s104, 1
        %s1602 = scalar_lea.sflag [#allocation4], %s1601
        %s1603 = sand.u32 %s104, 1
        %s1604 = smul.addr %s1603, 16
        %s1605 = scalar_lea.vmem [#allocation8], %s1604
        // Predicated region
        $region45: #{transformer_decoder_block.1} parent=31 // pred_check
          %p1606 = pneg %p114
        $region46: #{transformer_decoder_block.1} parent=31 // pred_check_branch
          %1608 = sbr.rel (%p1606) target = $region48
        $region47: #{transformer_decoder_block.1} parent=31 // pred_region
          %1610 = vsyncadd %s1602, 0
          %s1611 = smul.addr %s23, 2
          %s1612 = smul.addr %s1611, 8
          %s1613 = scalar_lea.hbm %s3, %s1612
          %s1614 = sshll.u32 %s1605, 4
          %s1615 = int_to_ptr.vmem [resolvable:$true] %s1614
          %s1616 = sshll.u32 %s1613, 4
          %s1617 = int_to_ptr.hbm [resolvable:$true] %s1616
          %1622 = dma.vmem_to_hbm [thread:$0]  %s1615, 256, %s1617, %s1602, 128, 128, 8
        $region48: #{transformer_decoder_block.1} parent=31 // pred_fallthru
          _
      $region32: #{transformer_decoder_block.1} parent=5 // pred_fallthru
        _
      %p1623 = scmp.le.s32.totalorder 2, %s18
      // Predicated region
      $region49: #{transformer_decoder_block.1} parent=5 // pred_check
        %p1624 = pneg %p1623
      $region50: #{transformer_decoder_block.1} parent=5 // pred_check_branch
        %1626 = sbr.rel (%p1624) target = $region52
      $region51: #{transformer_decoder_block.1} parent=5 // pred_region
        %s1627 = ssub.s32 %s18, 2
        // Predicated region
        $region53: #{transformer_decoder_block.1} parent=51 // pred_check
          %p1628 = pneg %p120
        $region54: #{transformer_decoder_block.1} parent=51 // pred_check_branch
          %1630 = sbr.rel (%p1628) target = $region56
        $region55: #{transformer_decoder_block.1} parent=51 // pred_region
          %s1631 = sand.u32 %s105, 1
          %s1632 = scalar_lea.sflag [#allocation4], %s1631
          %s1633 = sand.u32 %s105, 1
          %s1634 = smul.addr %s1633, 16
          %s1635 = scalar_lea.vmem [#allocation8], %s1634
          %1637 = dma.done %s1632, 256
        $region56: #{transformer_decoder_block.1} parent=51 // pred_fallthru
          _
      $region52: #{transformer_decoder_block.1} parent=5 // pred_fallthru
        _
    $region6: #{transformer_decoder_block.1} parent=1 // loop_footer
      %s22 = sadd.s32 1, %s18
    $region7: #{transformer_decoder_block.1} parent=1 // loop_footer_branch
      %17 = sbr.rel target = $region3
    $region8: #{transformer_decoder_block.1} parent=1 // loop_exit
      _
    %1638 = vsyncpa [#allocation3], 1
    %s1639 = scalar_lea.sflag [#allocation3], 1
    %1640 = vsyncpa %s1639, 1
    %1641 = vsyncpa [#allocation6], 1
    %s1642 = scalar_lea.sflag [#allocation6], 1
    %1643 = vsyncpa %s1642, 1
    %1644 = vsyncpa [#allocation4], 1
    %s1645 = scalar_lea.sflag [#allocation4], 1
    %1646 = vsyncpa %s1645, 1

</llo_original>
